<compile_context>
chip_gen: v7x
topology: tpu7x:2x2x1
jax: 0.10.0
libtpu: 0.0.40
codegen_flags: <defaults>
</compile_context>

<pallas_src>
import jax
import jax.numpy as jnp
from jax import lax
from jax.experimental import pallas as pl
from jax.experimental.pallas import tpu as pltpu


# ----------------------------- Pallas kernel --------------------------------
def encoder_kernel(
    # batch-tiled activations (bf16)
    act_ref,          # (tile_b, text_h + 8) = [text_pooler | temporal(6) | spatial(2)]
    emb_ref,          # (tile_b, 2*h4)       = [cat_emb_row | cnt_emb_row]
    # VMEM-resident weights / norm params
    wt_ref, bt_ref,                   # text projection
    w1_ref, b1_ref, w2_ref, b2_ref,   # fused block-diagonal temporal/spatial MLP
    wf_ref, bf_ref,                   # fusion matmul
    ln_g_ref, ln_b_ref,               # LayerNorm gamma / beta
    # output
    out_ref,
):
    f32 = jnp.float32
    bf16 = jnp.bfloat16

    text_h = wt_ref.shape[0]

    # --- text projection: Linear(text_hidden -> hidden), bf16 MXU, f32 acc --
    text = jnp.dot(act_ref[:, :text_h], wt_ref[...],
                   preferred_element_type=f32) + bt_ref[...]

    # --- fused temporal+spatial MLP (block-diagonal weights) ----------------
    # columns [text_h : text_h+8] of the activation slab are
    # concat([temporal(6), spatial(2)]); output is [tmp_feat | sp_feat].
    ts_in = act_ref[:, pl.ds(text_h, 8)]
    h = jnp.maximum(
        jnp.dot(ts_in, w1_ref[...], preferred_element_type=f32) + b1_ref[...],
        0.0)
    ts_feat = jnp.dot(h.astype(bf16), w2_ref[...],
                      preferred_element_type=f32) + b2_ref[...]

    # --- single fusion matmul over the concatenated features ----------------
    # order matches torch: [text, cat, cnt, temporal, spatial]; pieces are
    # cast to bf16 BEFORE the concat (half the concat/cast traffic).
    combined = jnp.concatenate(
        [text.astype(bf16), emb_ref[...], ts_feat.astype(bf16)], axis=-1)
    fused = jnp.dot(combined, wf_ref[...],
                    preferred_element_type=f32) + bf_ref[...]

    # --- LayerNorm(hidden), eps=1e-5, single-pass stats (variance clamped) ---
    mean = jnp.mean(fused, axis=-1, keepdims=True)
    msq = jnp.mean(fused * fused, axis=-1, keepdims=True)
    var = jnp.maximum(msq - mean * mean, 0.0)
    normed = (fused - mean) * lax.rsqrt(var + 1e-5)
    y = normed * ln_g_ref[...] + ln_b_ref[...]

    # --- ReLU; Dropout(0.1) is identity in eval mode -------------------------
    out_ref[...] = jnp.maximum(y, 0.0)


# ----------------------------- wrapper ---------------------------------------
def _prep_kernel_params(params):
    """Build the fused/bf16 weights the kernel consumes from logical params."""
    bf16 = jnp.bfloat16
    h4 = params["cat_emb"].shape[1]

    # block-diagonal first/second layers of the fused temporal+spatial MLP
    w1_ts = jnp.zeros((8, 2 * h4), jnp.float32)
    w1_ts = w1_ts.at[:6, :h4].set(params["wtm1"]).at[6:, h4:].set(params["wsp1"])
    b1_ts = jnp.concatenate([params["btm1"], params["bsp1"]], axis=-1)
    w2_ts = jnp.zeros((2 * h4, 2 * h4), jnp.float32)
    w2_ts = w2_ts.at[:h4, :h4].set(params["wtm2"]).at[h4:, h4:].set(params["wsp2"])
    b2_ts = jnp.concatenate([params["btm2"], params["bsp2"]], axis=-1)

    # single fusion weight over concat([text, cat, cnt, tmp, sp])
    wf = jnp.concatenate([params["wf_text"], params["wf_cat"], params["wf_cnt"],
                          params["wf_tmp"], params["wf_sp"]], axis=0)

    return dict(
        wt=params["wt"].astype(bf16), bt=params["bt"],
        cat_emb=params["cat_emb"].astype(bf16),   # bf16 tables: half the gather/DMA
        cnt_emb=params["cnt_emb"].astype(bf16),
        w1_ts=w1_ts.astype(bf16), b1_ts=b1_ts,
        w2_ts=w2_ts.astype(bf16), b2_ts=b2_ts,
        wf=wf.astype(bf16), bf=params["bf"],
        ln_g=params["ln_g"], ln_b=params["ln_b"],
    )


def multimodal_encoder_forward(inputs, params, *, tile_b=128):
    """inputs/params: dicts of arrays. Returns (B, hidden) float32.

    tile_b must be a multiple of 8.  Recommended: 128 on v5e, 256+ on v6e,
    256-512 on v7x (keep the batch grid >= 2 steps so both TCs are used).
    """
    bf16 = jnp.bfloat16
    kp = _prep_kernel_params(params)

    B = inputs["text_pooler"].shape[0]
    n_cat = kp["cat_emb"].shape[0]
    n_cnt = kp["cnt_emb"].shape[0]
    h4 = kp["cat_emb"].shape[1]
    text_h = kp["wt"].shape[0]
    hidden = kp["bt"].shape[-1]
    k_fuse = hidden + 4 * h4

    # --- wrapper-side preprocessing ------------------------------------------
    # one activation slab: [text_pooler | temporal(6) | spatial(2)]  (bf16)
    act = jnp.concatenate(
        [inputs["text_pooler"].astype(bf16),
         inputs["temporal_features"].astype(bf16),
         inputs["spatial_features"].astype(bf16)], axis=-1)
    # embedding lookup done here (no in-kernel gather); clamp bad ids.
    cat_ids = jnp.clip(inputs["category_ids"].astype(jnp.int32).reshape(-1),
                       0, n_cat - 1)
    cnt_ids = jnp.clip(inputs["country_ids"].astype(jnp.int32).reshape(-1),
                       0, n_cnt - 1)
    emb = jnp.concatenate(
        [jnp.take(kp["cat_emb"], cat_ids, axis=0),
         jnp.take(kp["cnt_emb"], cnt_ids, axis=0)], axis=-1)   # (B, 2*h4) bf16

    b_pad = ((B + tile_b - 1) // tile_b) * tile_b
    if b_pad != B:
        pad = b_pad - B
        act = jnp.pad(act, ((0, pad), (0, 0)))
        emb = jnp.pad(emb, ((0, pad), (0, 0)))

    args = (act, emb,
            kp["wt"], kp["bt"],
            kp["w1_ts"], kp["b1_ts"], kp["w2_ts"], kp["b2_ts"],
            kp["wf"], kp["bf"], kp["ln_g"], kp["ln_b"])

    # activations: tiled over batch; weights: full block, constant index_map
    # (DMA'd once, VMEM-resident across the whole grid).
    tiled = lambda feat: pl.BlockSpec((tile_b, feat), lambda i: (i, 0))
    resident = lambda shape: pl.BlockSpec(shape, lambda i: (0, 0))

    grid_spec = pltpu.PrefetchScalarGridSpec(
        num_scalar_prefetch=0,
        grid=(b_pad // tile_b,),
        in_specs=[
            tiled(text_h + 8),                   # [text | temporal | spatial]
            tiled(2 * h4),                       # gathered [cat | cnt] rows (bf16)
            resident((text_h, hidden)),          # wt
            resident((1, hidden)),               # bt
            resident((8, 2 * h4)),               # w1_ts (block-diag)
            resident((1, 2 * h4)),               # b1_ts
            resident((2 * h4, 2 * h4)),          # w2_ts (block-diag)
            resident((1, 2 * h4)),               # b2_ts
            resident((k_fuse, hidden)),          # wf (concatenated)
            resident((1, hidden)),               # bf
            resident((1, hidden)),               # ln_g
            resident((1, hidden)),               # ln_b
        ],
        out_specs=pl.BlockSpec((tile_b, hidden), lambda i: (i, 0)),
    )

    flops = 2 * b_pad * (text_h * hidden
                         + 8 * (2 * h4)
                         + (2 * h4) * (2 * h4)
                         + k_fuse * hidden)
    bytes_accessed = sum(int(a.size) * a.dtype.itemsize for a in args)
    bytes_accessed += b_pad * hidden * 4

    out = pl.pallas_call(
        encoder_kernel,
        out_shape=jax.ShapeDtypeStruct((b_pad, hidden), jnp.float32),
        grid_spec=grid_spec,
        compiler_params=pltpu.CompilerParams(
            dimension_semantics=("parallel",),        # megacore-shardable batch
            # 64 MiB: fits v7x physical VMEM; raise toward 96 MiB on v5e/v6e
            # when growing tile_b at production weight sizes.
            vmem_limit_bytes=64 * 1024 * 1024,
        ),
        cost_estimate=pl.CostEstimate(
            flops=int(flops), transcendentals=int(b_pad),
            bytes_accessed=int(bytes_accessed)),
    )(*args)
    return out[:B]


# ----------------------------- pure-JAX reference ----------------------------
def reference_forward(inputs, params):
    x = inputs["text_pooler"].astype(jnp.float32)
    text = x @ params["wt"] + params["bt"]
    cat_feat = params["cat_emb"][inputs["category_ids"]]
    cnt_feat = params["cnt_emb"][inputs["country_ids"]]
    h = jnp.maximum(inputs["temporal_features"] @ params["wtm1"] + params["btm1"], 0.0)
    tmp_feat = h @ params["wtm2"] + params["btm2"]
    h = jnp.maximum(inputs["spatial_features"] @ params["wsp1"] + params["bsp1"], 0.0)
    sp_feat = h @ params["wsp2"] + params["bsp2"]
    combined = jnp.concatenate([text, cat_feat, cnt_feat, tmp_feat, sp_feat], axis=-1)
    wf = jnp.concatenate([params["wf_text"], params["wf_cat"], params["wf_cnt"],
                          params["wf_tmp"], params["wf_sp"]], axis=0)
    fused = combined @ wf + params["bf"]
    mean = jnp.mean(fused, axis=-1, keepdims=True)
    var = jnp.mean((fused - mean) ** 2, axis=-1, keepdims=True)
    y = (fused - mean) * lax.rsqrt(var + 1e-5) * params["ln_g"] + params["ln_b"]
    return jnp.maximum(y, 0.0)


# ----------------------------- deterministic params --------------------------
def init_params(key, text_hidden, hidden, num_categories, num_countries):
    h4 = hidden // 4
    ks = jax.random.split(key, 18)

    def dense(k, shape, scale=0.05):
        return (scale * jax.random.normal(k, shape)).astype(jnp.float32)

    return {
        "wt": dense(ks[0], (text_hidden, hidden)),
        "bt": dense(ks[1], (1, hidden)),
        "cat_emb": dense(ks[2], (num_categories, h4)),
        "cnt_emb": dense(ks[3], (num_countries, h4)),
        "wtm1": dense(ks[4], (6, h4)),
        "btm1": dense(ks[5], (1, h4)),
        "wtm2": dense(ks[6], (h4, h4)),
        "btm2": dense(ks[7], (1, h4)),
        "wsp1": dense(ks[8], (2, h4)),
        "bsp1": dense(ks[9], (1, h4)),
        "wsp2": dense(ks[10], (h4, h4)),
        "bsp2": dense(ks[11], (1, h4)),
        # fusion weight split by input block (text | cat | cnt | temporal | spatial)
        "wf_text": dense(ks[12], (hidden, hidden)),
        "wf_cat": dense(ks[13], (h4, hidden)),
        "wf_cnt": dense(ks[14], (h4, hidden)),
        "wf_tmp": dense(ks[15], (h4, hidden)),
        "wf_sp": dense(ks[16], (h4, hidden)),
        "bf": dense(ks[17], (1, hidden)),
        "ln_g": jnp.ones((1, hidden), jnp.float32),
        "ln_b": jnp.zeros((1, hidden), jnp.float32),
    }


# ----------------------------- main -------------------------------------------
if __name__ == "__main__":
    B = 200               # pads to 256 -> 2 grid steps of tile_b=128
    TEXT_HIDDEN = 128     # small stand-in for BERT's 768-wide pooler output
    HIDDEN = 128          # multiple of 128 -> lane-dense output stores
    NUM_CATEGORIES = 20
    NUM_COUNTRIES = 200

    key = jax.random.PRNGKey(0)
    k_in, k_p = jax.random.split(key)
    k0, k1, k2, k3, k4 = jax.random.split(k_in, 5)

    inputs = {
        "text_pooler": jax.random.normal(k0, (B, TEXT_HIDDEN), jnp.float32),
        "category_ids": jax.random.randint(k1, (B,), 0, NUM_CATEGORIES, jnp.int32),
        "country_ids": jax.random.randint(k2, (B,), 0, NUM_COUNTRIES, jnp.int32),
        "temporal_features": jax.random.normal(k3, (B, 6), jnp.float32),
        "spatial_features": jax.random.normal(k4, (B, 2), jnp.float32),
    }
    params = init_params(k_p, TEXT_HIDDEN, HIDDEN, NUM_CATEGORIES, NUM_COUNTRIES)

    out = multimodal_encoder_forward(inputs, params, tile_b=128)
    out = jax.block_until_ready(out)

    ref = jax.block_until_ready(reference_forward(inputs, params))
    assert out.shape == (B, HIDDEN)
    # bf16 matmul operands / tables vs f32 reference -> loose tolerance
    assert jnp.allclose(out, ref, atol=5e-2, rtol=5e-2), (
        "mismatch vs JAX reference, max abs diff = "
        f"{float(jnp.max(jnp.abs(out - ref)))}")

    print("KERNEL_OK")
</pallas_src>

<mosaic_0001>
module attributes {stable_mosaic.version = 11 : i64} {
  func.func @encoder_kernel(%arg0: i32, %arg1: memref<128x136xbf16, #tpu.memory_space<vmem>>, %arg2: memref<128x64xbf16, #tpu.memory_space<vmem>>, %arg3: memref<128x128xbf16, #tpu.memory_space<vmem>>, %arg4: memref<1x128xf32, #tpu.memory_space<vmem>>, %arg5: memref<8x64xbf16, #tpu.memory_space<vmem>>, %arg6: memref<1x64xf32, #tpu.memory_space<vmem>>, %arg7: memref<64x64xbf16, #tpu.memory_space<vmem>>, %arg8: memref<1x64xf32, #tpu.memory_space<vmem>>, %arg9: memref<256x128xbf16, #tpu.memory_space<vmem>>, %arg10: memref<1x128xf32, #tpu.memory_space<vmem>>, %arg11: memref<1x128xf32, #tpu.memory_space<vmem>>, %arg12: memref<1x128xf32, #tpu.memory_space<vmem>>, %arg13: memref<128x128xf32, #tpu.memory_space<vmem>>) attributes {dimension_semantics = [#tpu.dimension_semantics<parallel>], iteration_bounds = array<i64: 2>, scalar_prefetch = 0 : i64, scratch_operands = 0 : i64, tpu.core_type = #tpu.core_type<tc>, window_params = [{transform_indices = @transform_0, window_bounds = array<i64: 128, 136>}, {transform_indices = @transform_1, window_bounds = array<i64: 128, 64>}, {pipeline_mode = #tpu.pipeline_mode<synchronous>, transform_indices = @transform_2, window_bounds = array<i64: 128, 128>}, {pipeline_mode = #tpu.pipeline_mode<synchronous>, transform_indices = @transform_3, window_bounds = array<i64: 1, 128>}, {pipeline_mode = #tpu.pipeline_mode<synchronous>, transform_indices = @transform_4, window_bounds = array<i64: 8, 64>}, {pipeline_mode = #tpu.pipeline_mode<synchronous>, transform_indices = @transform_5, window_bounds = array<i64: 1, 64>}, {pipeline_mode = #tpu.pipeline_mode<synchronous>, transform_indices = @transform_6, window_bounds = array<i64: 64, 64>}, {pipeline_mode = #tpu.pipeline_mode<synchronous>, transform_indices = @transform_7, window_bounds = array<i64: 1, 64>}, {pipeline_mode = #tpu.pipeline_mode<synchronous>, transform_indices = @transform_8, window_bounds = array<i64: 256, 128>}, {pipeline_mode = #tpu.pipeline_mode<synchronous>, transform_indices = @transform_9, window_bounds = array<i64: 1, 128>}, {pipeline_mode = #tpu.pipeline_mode<synchronous>, transform_indices = @transform_10, window_bounds = array<i64: 1, 128>}, {pipeline_mode = #tpu.pipeline_mode<synchronous>, transform_indices = @transform_11, window_bounds = array<i64: 1, 128>}, {transform_indices = @transform_12, window_bounds = array<i64: 128, 128>}]} {
    %c0 = arith.constant 0 : index
    %c0_0 = arith.constant 0 : index
    %0 = vector.load %arg1[%c0, %c0_0] : memref<128x136xbf16, #tpu.memory_space<vmem>>, vector<128x128xbf16>
    %c0_1 = arith.constant 0 : index
    %c0_2 = arith.constant 0 : index
    %1 = vector.load %arg3[%c0_1, %c0_2] : memref<128x128xbf16, #tpu.memory_space<vmem>>, vector<128x128xbf16>
    %cst = arith.constant dense<0.000000e+00> : vector<128x128xf32>
    %2 = tpu.matmul %0, %1, %cst {dimension_numbers = #tpu.dot_dimension_numbers<[1], [0], [0], [1], [0, 0, 1, 1], [], []>} : vector<128x128xbf16>, vector<128x128xbf16>, vector<128x128xf32> -> vector<128x128xf32>
    %c0_3 = arith.constant 0 : index
    %c0_4 = arith.constant 0 : index
    %3 = vector.load %arg4[%c0_3, %c0_4] : memref<1x128xf32, #tpu.memory_space<vmem>>, vector<1x128xf32>
    %4 = vector.broadcast %3 : vector<1x128xf32> to vector<128x128xf32>
    %5 = arith.addf %2, %4 : vector<128x128xf32>
    %c0_5 = arith.constant 0 : index
    %c128 = arith.constant 128 : index
    %6 = vector.load %arg1[%c0_5, %c128] : memref<128x136xbf16, #tpu.memory_space<vmem>>, vector<128x8xbf16>
    %c0_6 = arith.constant 0 : index
    %c0_7 = arith.constant 0 : index
    %7 = vector.load %arg5[%c0_6, %c0_7] : memref<8x64xbf16, #tpu.memory_space<vmem>>, vector<8x64xbf16>
    %cst_8 = arith.constant dense<0.000000e+00> : vector<128x64xf32>
    %8 = tpu.matmul %6, %7, %cst_8 {dimension_numbers = #tpu.dot_dimension_numbers<[1], [0], [0], [1], [0, 0, 1, 1], [], []>} : vector<128x8xbf16>, vector<8x64xbf16>, vector<128x64xf32> -> vector<128x64xf32>
    %c0_9 = arith.constant 0 : index
    %c0_10 = arith.constant 0 : index
    %9 = vector.load %arg6[%c0_9, %c0_10] : memref<1x64xf32, #tpu.memory_space<vmem>>, vector<1x64xf32>
    %10 = vector.broadcast %9 : vector<1x64xf32> to vector<128x64xf32>
    %11 = arith.addf %8, %10 : vector<128x64xf32>
    %cst_11 = arith.constant 0.000000e+00 : f32
    %12 = vector.broadcast %cst_11 : f32 to vector<128x64xf32>
    %13 = arith.maximumf %11, %12 : vector<128x64xf32>
    %14 = arith.truncf %13 : vector<128x64xf32> to vector<128x64xbf16>
    %c0_12 = arith.constant 0 : index
    %c0_13 = arith.constant 0 : index
    %15 = vector.load %arg7[%c0_12, %c0_13] : memref<64x64xbf16, #tpu.memory_space<vmem>>, vector<64x64xbf16>
    %cst_14 = arith.constant dense<0.000000e+00> : vector<128x64xf32>
    %16 = tpu.matmul %14, %15, %cst_14 {dimension_numbers = #tpu.dot_dimension_numbers<[1], [0], [0], [1], [0, 0, 1, 1], [], []>} : vector<128x64xbf16>, vector<64x64xbf16>, vector<128x64xf32> -> vector<128x64xf32>
    %c0_15 = arith.constant 0 : index
    %c0_16 = arith.constant 0 : index
    %17 = vector.load %arg8[%c0_15, %c0_16] : memref<1x64xf32, #tpu.memory_space<vmem>>, vector<1x64xf32>
    %18 = vector.broadcast %17 : vector<1x64xf32> to vector<128x64xf32>
    %19 = arith.addf %16, %18 : vector<128x64xf32>
    %20 = arith.truncf %5 : vector<128x128xf32> to vector<128x128xbf16>
    %c0_17 = arith.constant 0 : index
    %c0_18 = arith.constant 0 : index
    %21 = vector.load %arg2[%c0_17, %c0_18] : memref<128x64xbf16, #tpu.memory_space<vmem>>, vector<128x64xbf16>
    %22 = arith.truncf %19 : vector<128x64xf32> to vector<128x64xbf16>
    %23 = tpu.concatenate %20, %21, %22 in 1 : vector<128x128xbf16>, vector<128x64xbf16>, vector<128x64xbf16> -> vector<128x256xbf16>
    %c0_19 = arith.constant 0 : index
    %c0_20 = arith.constant 0 : index
    %24 = vector.load %arg9[%c0_19, %c0_20] : memref<256x128xbf16, #tpu.memory_space<vmem>>, vector<256x128xbf16>
    %cst_21 = arith.constant dense<0.000000e+00> : vector<128x128xf32>
    %25 = tpu.matmul %23, %24, %cst_21 {dimension_numbers = #tpu.dot_dimension_numbers<[1], [0], [0], [1], [0, 0, 1, 1], [], []>} : vector<128x256xbf16>, vector<256x128xbf16>, vector<128x128xf32> -> vector<128x128xf32>
    %c0_22 = arith.constant 0 : index
    %c0_23 = arith.constant 0 : index
    %26 = vector.load %arg10[%c0_22, %c0_23] : memref<1x128xf32, #tpu.memory_space<vmem>>, vector<1x128xf32>
    %27 = vector.broadcast %26 : vector<1x128xf32> to vector<128x128xf32>
    %28 = arith.addf %25, %27 : vector<128x128xf32>
    %cst_24 = arith.constant dense<0.000000e+00> : vector<128xf32>
    %29 = vector.multi_reduction <add>, %28, %cst_24 [1] : vector<128x128xf32> to vector<128xf32>
    %30 = vector.shape_cast %29 : vector<128xf32> to vector<128x1xf32>
    %cst_25 = arith.constant 1.280000e+02 : f32
    %31 = vector.broadcast %cst_25 : f32 to vector<128x1xf32>
    %32 = arith.divf %30, %31 : vector<128x1xf32>
    %33 = arith.mulf %28, %28 : vector<128x128xf32>
    %cst_26 = arith.constant dense<0.000000e+00> : vector<128xf32>
    %34 = vector.multi_reduction <add>, %33, %cst_26 [1] : vector<128x128xf32> to vector<128xf32>
    %35 = vector.shape_cast %34 : vector<128xf32> to vector<128x1xf32>
    %cst_27 = arith.constant 1.280000e+02 : f32
    %36 = vector.broadcast %cst_27 : f32 to vector<128x1xf32>
    %37 = arith.divf %35, %36 : vector<128x1xf32>
    %38 = arith.mulf %32, %32 : vector<128x1xf32>
    %39 = arith.subf %37, %38 : vector<128x1xf32>
    %cst_28 = arith.constant 0.000000e+00 : f32
    %40 = vector.broadcast %cst_28 : f32 to vector<128x1xf32>
    %41 = arith.maximumf %39, %40 : vector<128x1xf32>
    %42 = vector.broadcast %32 : vector<128x1xf32> to vector<128x128xf32>
    %43 = arith.subf %28, %42 : vector<128x128xf32>
    %cst_29 = arith.constant 9.99999974E-6 : f32
    %44 = vector.broadcast %cst_29 : f32 to vector<128x1xf32>
    %45 = arith.addf %41, %44 : vector<128x1xf32>
    %46 = math.rsqrt %45 : vector<128x1xf32>
    %47 = vector.broadcast %46 : vector<128x1xf32> to vector<128x128xf32>
    %48 = arith.mulf %43, %47 : vector<128x128xf32>
    %c0_30 = arith.constant 0 : index
    %c0_31 = arith.constant 0 : index
    %49 = vector.load %arg11[%c0_30, %c0_31] : memref<1x128xf32, #tpu.memory_space<vmem>>, vector<1x128xf32>
    %50 = vector.broadcast %49 : vector<1x128xf32> to vector<128x128xf32>
    %51 = arith.mulf %48, %50 : vector<128x128xf32>
    %c0_32 = arith.constant 0 : index
    %c0_33 = arith.constant 0 : index
    %52 = vector.load %arg12[%c0_32, %c0_33] : memref<1x128xf32, #tpu.memory_space<vmem>>, vector<1x128xf32>
    %53 = vector.broadcast %52 : vector<1x128xf32> to vector<128x128xf32>
    %54 = arith.addf %51, %53 : vector<128x128xf32>
    %cst_34 = arith.constant 0.000000e+00 : f32
    %55 = vector.broadcast %cst_34 : f32 to vector<128x128xf32>
    %56 = arith.maximumf %54, %55 : vector<128x128xf32>
    %c0_35 = arith.constant 0 : index
    %c0_36 = arith.constant 0 : index
    %57 = vector.load %arg13[%c0_35, %c0_36] : memref<128x128xf32, #tpu.memory_space<vmem>>, vector<128x128xf32>
    tpu.vector_store %arg13[%c0_35, %c0_36], %56 {strides = array<i32>} : memref<128x128xf32, #tpu.memory_space<vmem>>, vector<128x128xf32>,
    return
  }
  func.func @transform_0(%arg0: i32) -> (i32, i32) {
    %c0_i32 = arith.constant 0 : i32
    %c0_i32_0 = arith.constant 0 : i32
    return %arg0, %c0_i32 : i32, i32
  }
  func.func @transform_1(%arg0: i32) -> (i32, i32) {
    %c0_i32 = arith.constant 0 : i32
    %c0_i32_0 = arith.constant 0 : i32
    return %arg0, %c0_i32 : i32, i32
  }
  func.func @transform_2(%arg0: i32) -> (i32, i32) {
    %c0_i32 = arith.constant 0 : i32
    %c0_i32_0 = arith.constant 0 : i32
    %c0_i32_1 = arith.constant 0 : i32
    return %c0_i32, %c0_i32_0 : i32, i32
  }
  func.func @transform_3(%arg0: i32) -> (i32, i32) {
    %c0_i32 = arith.constant 0 : i32
    %c0_i32_0 = arith.constant 0 : i32
    %c0_i32_1 = arith.constant 0 : i32
    return %c0_i32, %c0_i32_0 : i32, i32
  }
  func.func @transform_4(%arg0: i32) -> (i32, i32) {
    %c0_i32 = arith.constant 0 : i32
    %c0_i32_0 = arith.constant 0 : i32
    %c0_i32_1 = arith.constant 0 : i32
    return %c0_i32, %c0_i32_0 : i32, i32
  }
  func.func @transform_5(%arg0: i32) -> (i32, i32) {
    %c0_i32 = arith.constant 0 : i32
    %c0_i32_0 = arith.constant 0 : i32
    %c0_i32_1 = arith.constant 0 : i32
    return %c0_i32, %c0_i32_0 : i32, i32
  }
  func.func @transform_6(%arg0: i32) -> (i32, i32) {
    %c0_i32 = arith.constant 0 : i32
    %c0_i32_0 = arith.constant 0 : i32
    %c0_i32_1 = arith.constant 0 : i32
    return %c0_i32, %c0_i32_0 : i32, i32
  }
  func.func @transform_7(%arg0: i32) -> (i32, i32) {
    %c0_i32 = arith.constant 0 : i32
    %c0_i32_0 = arith.constant 0 : i32
    %c0_i32_1 = arith.constant 0 : i32
    return %c0_i32, %c0_i32_0 : i32, i32
  }
  func.func @transform_8(%arg0: i32) -> (i32, i32) {
    %c0_i32 = arith.constant 0 : i32
    %c0_i32_0 = arith.constant 0 : i32
    %c0_i32_1 = arith.constant 0 : i32
    return %c0_i32, %c0_i32_0 : i32, i32
  }
  func.func @transform_9(%arg0: i32) -> (i32, i32) {
    %c0_i32 = arith.constant 0 : i32
    %c0_i32_0 = arith.constant 0 : i32
    %c0_i32_1 = arith.constant 0 : i32
    return %c0_i32, %c0_i32_0 : i32, i32
  }
  func.func @transform_10(%arg0: i32) -> (i32, i32) {
    %c0_i32 = arith.constant 0 : i32
    %c0_i32_0 = arith.constant 0 : i32
    %c0_i32_1 = arith.constant 0 : i32
    return %c0_i32, %c0_i32_0 : i32, i32
  }
  func.func @transform_11(%arg0: i32) -> (i32, i32) {
    %c0_i32 = arith.constant 0 : i32
    %c0_i32_0 = arith.constant 0 : i32
    %c0_i32_1 = arith.constant 0 : i32
    return %c0_i32, %c0_i32_0 : i32, i32
  }
  func.func @transform_12(%arg0: i32) -> (i32, i32) {
    %c0_i32 = arith.constant 0 : i32
    %c0_i32_0 = arith.constant 0 : i32
    return %arg0, %c0_i32 : i32, i32
  }
}

</mosaic_0001>

<llo_original>
// kernel: tpu_custom_call.1
$region0: #{tpu_custom_call.1}
  #allocation0 [shape = 'u32[]', space=smem, size = 0x4, offset = 0x4, fixed_abs, tag = 'smem constant byte address 0x4 - core index']
  #allocation1 [shape = 'u32[144,128]{1,0:T(1,128)}', space=vmem, size = 0x12000, scoped, tag = 'internal scratch']
  %s0 = inlined_call_operand.hbm [shape: bf16[256,136], index: 0, kind: input, shape index: {}]
  %s1 = inlined_call_operand.hbm [shape: bf16[256,64], index: 1, kind: input, shape index: {}]
  %s2 = inlined_call_operand.hbm [shape: bf16[128,128], index: 2, kind: input, shape index: {}]
  %s3 = inlined_call_operand.hbm [shape: f32[1,128], index: 3, kind: input, shape index: {}]
  %s4 = inlined_call_operand.hbm [shape: bf16[8,64], index: 4, kind: input, shape index: {}]
  %s5 = inlined_call_operand.hbm [shape: f32[1,64], index: 5, kind: input, shape index: {}]
  %s6 = inlined_call_operand.hbm [shape: bf16[64,64], index: 6, kind: input, shape index: {}]
  %s7 = inlined_call_operand.hbm [shape: f32[1,64], index: 7, kind: input, shape index: {}]
  %s8 = inlined_call_operand.hbm [shape: bf16[256,128], index: 8, kind: input, shape index: {}]
  %s9 = inlined_call_operand.hbm [shape: f32[1,128], index: 9, kind: input, shape index: {}]
  %s10 = inlined_call_operand.hbm [shape: f32[1,128], index: 10, kind: input, shape index: {}]
  %s11 = inlined_call_operand.hbm [shape: f32[1,128], index: 11, kind: input, shape index: {}]
  %s12 = inlined_call_operand.hbm [shape: f32[256,128], index: 12, kind: output, shape index: {}]
  %s13 = sld [smem:[#allocation0]]
  $region129: #{tpu_custom_call.1} parent=0
    _
  %s15 = ssub.s32 1, %s13
  %s16 = scalar_select 0, %s15, %s13
  $region1: #{tpu_custom_call.1} parent=0
    #allocation2 [shape = 'u8[131072]{0}', space=vmem, size = 0x20000, scoped, tag = 'input window, operand 0']
    #allocation3 [shape = 's32[2]{0}', space=sflag, size = 0x8, scoped, tag = 'scoped memory for tpu_custom_call.1']
    #allocation4 [shape = 's32[2]{0}', space=sflag, size = 0x8, scoped, tag = 'scoped memory for tpu_custom_call.1']
    #allocation5 [shape = 'u8[65536]{0}', space=vmem, size = 0x10000, scoped, tag = 'input window, operand 1']
    #allocation6 [shape = 's32[2]{0}', space=sflag, size = 0x8, scoped, tag = 'scoped memory for tpu_custom_call.1']
    #allocation7 [shape = 'u8[32768]{0}', space=vmem, size = 0x8000, scoped, tag = 'input window, operand 2, single buffered']
    #allocation8 [shape = 'u8[512]{0}', space=vmem, size = 0x400, scoped, tag = 'input window, operand 3, single buffered']
    #allocation9 [shape = 's32[1]{0}', space=sflag, size = 0x4, scoped, tag = 'scoped memory for tpu_custom_call.1']
    #allocation10 [shape = 'u8[2048]{0}', space=vmem, size = 0x800, scoped, tag = 'input window, operand 4, single buffered']
    #allocation11 [shape = 'u8[512]{0}', space=vmem, size = 0x400, scoped, tag = 'input window, operand 5, single buffered']
    #allocation12 [shape = 's32[1]{0}', space=sflag, size = 0x4, scoped, tag = 'scoped memory for tpu_custom_call.1']
    #allocation13 [shape = 'u8[16384]{0}', space=vmem, size = 0x4000, scoped, tag = 'input window, operand 6, single buffered']
    #allocation14 [shape = 'u8[512]{0}', space=vmem, size = 0x400, scoped, tag = 'input window, operand 7, single buffered']
    #allocation15 [shape = 's32[1]{0}', space=sflag, size = 0x4, scoped, tag = 'scoped memory for tpu_custom_call.1']
    #allocation16 [shape = 'u8[65536]{0}', space=vmem, size = 0x10000, scoped, tag = 'input window, operand 8, single buffered']
    #allocation17 [shape = 'u8[512]{0}', space=vmem, size = 0x400, scoped, tag = 'input window, operand 9, single buffered']
    #allocation18 [shape = 's32[1]{0}', space=sflag, size = 0x4, scoped, tag = 'scoped memory for tpu_custom_call.1']
    #allocation19 [shape = 'u8[512]{0}', space=vmem, size = 0x400, scoped, tag = 'input window, operand 10, single buffered']
    #allocation20 [shape = 'u8[512]{0}', space=vmem, size = 0x400, scoped, tag = 'input window, operand 11, single buffered']
    #allocation21 [shape = 's32[1]{0}', space=sflag, size = 0x4, scoped, tag = 'scoped memory for tpu_custom_call.1']
    #allocation22 [shape = 'u8[131072]{0}', space=vmem, size = 0x20000, scoped, tag = 'output window, operand 0']
    %17 = vsyncpa [#allocation3], 0
    %s18 = scalar_lea.sflag [#allocation3], 1
    %19 = vsyncpa %s18, 0
    %20 = vsyncpa [#allocation6], 0
    %s21 = scalar_lea.sflag [#allocation6], 1
    %22 = vsyncpa %s21, 0
    %23 = vsyncpa [#allocation9], 0
    %24 = vsyncpa [#allocation12], 0
    %25 = vsyncpa [#allocation15], 0
    %26 = vsyncpa [#allocation18], 0
    %27 = vsyncpa [#allocation21], 0
    %28 = vsyncpa [#allocation4], 0
    %s29 = scalar_lea.sflag [#allocation4], 1
    %30 = vsyncpa %s29, 0
    loop: start=0, step=1, limit=4
    $region2: #{tpu_custom_call.1} parent=1 // loop_pre_header
      _
    $region3: #{tpu_custom_call.1} parent=1 // loop_header
      %s32 = sphi 0, %s36
      %p33 = scmp.ge.s32.totalorder %s32, 4
      %s42 = sphi 0, %s44
      %s45 = sphi 0, %s42
      %s46 = sphi 0, %s45
      %s62 = sphi 0, %s46
      %s68 = sphi 0, %s70
      %s71 = sphi 0, %s68
      %s72 = sphi 0, %s71
      %s88 = sphi 0, %s72
      %s92 = sphi 0, %s92
      %s94 = sphi 0, %s92
      %s95 = sphi 0, %s94
      %s109 = sphi 0, %s95
      %s113 = sphi 0, %s113
      %s115 = sphi 0, %s113
      %s116 = sphi 0, %s115
      %s130 = sphi 0, %s116
      %s134 = sphi 0, %s134
      %s136 = sphi 0, %s134
      %s137 = sphi 0, %s136
      %s151 = sphi 0, %s137
      %s155 = sphi 0, %s155
      %s157 = sphi 0, %s155
      %s158 = sphi 0, %s157
      %s172 = sphi 0, %s158
      %s176 = sphi 0, %s176
      %s178 = sphi 0, %s176
      %s179 = sphi 0, %s178
      %s193 = sphi 0, %s179
      %s197 = sphi 0, %s197
      %s199 = sphi 0, %s197
      %s200 = sphi 0, %s199
      %s214 = sphi 0, %s200
      %s218 = sphi 0, %s218
      %s220 = sphi 0, %s218
      %s221 = sphi 0, %s220
      %s235 = sphi 0, %s221
      %s239 = sphi 0, %s239
      %s241 = sphi 0, %s239
      %s242 = sphi 0, %s241
      %s256 = sphi 0, %s242
      %s260 = sphi 0, %s260
      %s262 = sphi 0, %s260
      %s263 = sphi 0, %s262
      %s277 = sphi 0, %s263
      %s281 = sphi 0, %s281
      %s283 = sphi 0, %s281
      %s284 = sphi 0, %s283
      %s298 = sphi 0, %s284
      %s304 = sphi 0, %s306
      %s307 = sphi 0, %s304
      %s308 = sphi 0, %s307
      %s324 = sphi 0, %s308
    $region4: #{tpu_custom_call.1} parent=1 // loop_header_branch
      %35 = sbr.rel (%p33) target = $region8
    $region5: #{tpu_custom_call.1} parent=1 // loop_body
      %s37 = ssub.s32 %s32, 1
      %s38 = ssub.s32 %s32, 2
      %s39 = sadd.s32 %s32, 1
      %s40 = ssub.s32 %s32, %s39
      %p41 = scmp.eq.s32.totalorder %s40, 0
      %s43 = sadd.s32 %s42, 1
      %s44 = scalar_select %p41, %s42, %s43
      %p47 = pneg %p41
      %p48 = scmp.eq.s32.totalorder %s32, 1
      %p49 = por %p47, %p48
      %p50 = scmp.ne.s32.totalorder %s42, %s45
      %p51 = scmp.eq.s32.totalorder %s32, 0
      %p52 = por %p50, %p51
      %p53 = scmp.ne.s32.totalorder %s42, %s45
      %p54 = scmp.eq.s32.totalorder %s37, 1
      %p55 = por %p53, %p54
      %p56 = scmp.ne.s32.totalorder %s45, %s46
      %p57 = scmp.eq.s32.totalorder %s37, 0
      %p58 = por %p56, %p57
      %p59 = scmp.ne.s32.totalorder %s45, %s46
      %p60 = scmp.eq.s32.totalorder %s38, 1
      %p61 = por %p59, %p60
      %p63 = scmp.ne.s32.totalorder %s46, %s62
      %p64 = scmp.eq.s32.totalorder %s38, 0
      %p65 = por %p63, %p64
      %s66 = ssub.s32 %s32, %s39
      %p67 = scmp.eq.s32.totalorder %s66, 0
      %s69 = sadd.s32 %s68, 1
      %s70 = scalar_select %p67, %s68, %s69
      %p73 = pneg %p67
      %p74 = scmp.eq.s32.totalorder %s32, 1
      %p75 = por %p73, %p74
      %p76 = scmp.ne.s32.totalorder %s68, %s71
      %p77 = scmp.eq.s32.totalorder %s32, 0
      %p78 = por %p76, %p77
      %p79 = scmp.ne.s32.totalorder %s68, %s71
      %p80 = scmp.eq.s32.totalorder %s37, 1
      %p81 = por %p79, %p80
      %p82 = scmp.ne.s32.totalorder %s71, %s72
      %p83 = scmp.eq.s32.totalorder %s37, 0
      %p84 = por %p82, %p83
      %p85 = scmp.ne.s32.totalorder %s71, %s72
      %p86 = scmp.eq.s32.totalorder %s38, 1
      %p87 = por %p85, %p86
      %p89 = scmp.ne.s32.totalorder %s72, %s88
      %p90 = scmp.eq.s32.totalorder %s38, 0
      %p91 = por %p89, %p90
      %s93 = sadd.s32 %s92, 1
      %p96 = scmp.eq.s32.totalorder %s32, 1
      %p97 = scmp.ne.s32.totalorder %s92, %s94
      %p98 = scmp.eq.s32.totalorder %s32, 0
      %p99 = por %p97, %p98
      %p100 = scmp.ne.s32.totalorder %s92, %s94
      %p101 = scmp.eq.s32.totalorder %s37, 1
      %p102 = por %p100, %p101
      %p103 = scmp.ne.s32.totalorder %s94, %s95
      %p104 = scmp.eq.s32.totalorder %s37, 0
      %p105 = por %p103, %p104
      %p106 = scmp.ne.s32.totalorder %s94, %s95
      %p107 = scmp.eq.s32.totalorder %s38, 1
      %p108 = por %p106, %p107
      %p110 = scmp.ne.s32.totalorder %s95, %s109
      %p111 = scmp.eq.s32.totalorder %s38, 0
      %p112 = por %p110, %p111
      %s114 = sadd.s32 %s113, 1
      %p117 = scmp.eq.s32.totalorder %s32, 1
      %p118 = scmp.ne.s32.totalorder %s113, %s115
      %p119 = scmp.eq.s32.totalorder %s32, 0
      %p120 = por %p118, %p119
      %p121 = scmp.ne.s32.totalorder %s113, %s115
      %p122 = scmp.eq.s32.totalorder %s37, 1
      %p123 = por %p121, %p122
      %p124 = scmp.ne.s32.totalorder %s115, %s116
      %p125 = scmp.eq.s32.totalorder %s37, 0
      %p126 = por %p124, %p125
      %p127 = scmp.ne.s32.totalorder %s115, %s116
      %p128 = scmp.eq.s32.totalorder %s38, 1
      %p129 = por %p127, %p128
      %p131 = scmp.ne.s32.totalorder %s116, %s130
      %p132 = scmp.eq.s32.totalorder %s38, 0
      %p133 = por %p131, %p132
      %s135 = sadd.s32 %s134, 1
      %p138 = scmp.eq.s32.totalorder %s32, 1
      %p139 = scmp.ne.s32.totalorder %s134, %s136
      %p140 = scmp.eq.s32.totalorder %s32, 0
      %p141 = por %p139, %p140
      %p142 = scmp.ne.s32.totalorder %s134, %s136
      %p143 = scmp.eq.s32.totalorder %s37, 1
      %p144 = por %p142, %p143
      %p145 = scmp.ne.s32.totalorder %s136, %s137
      %p146 = scmp.eq.s32.totalorder %s37, 0
      %p147 = por %p145, %p146
      %p148 = scmp.ne.s32.totalorder %s136, %s137
      %p149 = scmp.eq.s32.totalorder %s38, 1
      %p150 = por %p148, %p149
      %p152 = scmp.ne.s32.totalorder %s137, %s151
      %p153 = scmp.eq.s32.totalorder %s38, 0
      %p154 = por %p152, %p153
      %s156 = sadd.s32 %s155, 1
      %p159 = scmp.eq.s32.totalorder %s32, 1
      %p160 = scmp.ne.s32.totalorder %s155, %s157
      %p161 = scmp.eq.s32.totalorder %s32, 0
      %p162 = por %p160, %p161
      %p163 = scmp.ne.s32.totalorder %s155, %s157
      %p164 = scmp.eq.s32.totalorder %s37, 1
      %p165 = por %p163, %p164
      %p166 = scmp.ne.s32.totalorder %s157, %s158
      %p167 = scmp.eq.s32.totalorder %s37, 0
      %p168 = por %p166, %p167
      %p169 = scmp.ne.s32.totalorder %s157, %s158
      %p170 = scmp.eq.s32.totalorder %s38, 1
      %p171 = por %p169, %p170
      %p173 = scmp.ne.s32.totalorder %s158, %s172
      %p174 = scmp.eq.s32.totalorder %s38, 0
      %p175 = por %p173, %p174
      %s177 = sadd.s32 %s176, 1
      %p180 = scmp.eq.s32.totalorder %s32, 1
      %p181 = scmp.ne.s32.totalorder %s176, %s178
      %p182 = scmp.eq.s32.totalorder %s32, 0
      %p183 = por %p181, %p182
      %p184 = scmp.ne.s32.totalorder %s176, %s178
      %p185 = scmp.eq.s32.totalorder %s37, 1
      %p186 = por %p184, %p185
      %p187 = scmp.ne.s32.totalorder %s178, %s179
      %p188 = scmp.eq.s32.totalorder %s37, 0
      %p189 = por %p187, %p188
      %p190 = scmp.ne.s32.totalorder %s178, %s179
      %p191 = scmp.eq.s32.totalorder %s38, 1
      %p192 = por %p190, %p191
      %p194 = scmp.ne.s32.totalorder %s179, %s193
      %p195 = scmp.eq.s32.totalorder %s38, 0
      %p196 = por %p194, %p195
      %s198 = sadd.s32 %s197, 1
      %p201 = scmp.eq.s32.totalorder %s32, 1
      %p202 = scmp.ne.s32.totalorder %s197, %s199
      %p203 = scmp.eq.s32.totalorder %s32, 0
      %p204 = por %p202, %p203
      %p205 = scmp.ne.s32.totalorder %s197, %s199
      %p206 = scmp.eq.s32.totalorder %s37, 1
      %p207 = por %p205, %p206
      %p208 = scmp.ne.s32.totalorder %s199, %s200
      %p209 = scmp.eq.s32.totalorder %s37, 0
      %p210 = por %p208, %p209
      %p211 = scmp.ne.s32.totalorder %s199, %s200
      %p212 = scmp.eq.s32.totalorder %s38, 1
      %p213 = por %p211, %p212
      %p215 = scmp.ne.s32.totalorder %s200, %s214
      %p216 = scmp.eq.s32.totalorder %s38, 0
      %p217 = por %p215, %p216
      %s219 = sadd.s32 %s218, 1
      %p222 = scmp.eq.s32.totalorder %s32, 1
      %p223 = scmp.ne.s32.totalorder %s218, %s220
      %p224 = scmp.eq.s32.totalorder %s32, 0
      %p225 = por %p223, %p224
      %p226 = scmp.ne.s32.totalorder %s218, %s220
      %p227 = scmp.eq.s32.totalorder %s37, 1
      %p228 = por %p226, %p227
      %p229 = scmp.ne.s32.totalorder %s220, %s221
      %p230 = scmp.eq.s32.totalorder %s37, 0
      %p231 = por %p229, %p230
      %p232 = scmp.ne.s32.totalorder %s220, %s221
      %p233 = scmp.eq.s32.totalorder %s38, 1
      %p234 = por %p232, %p233
      %p236 = scmp.ne.s32.totalorder %s221, %s235
      %p237 = scmp.eq.s32.totalorder %s38, 0
      %p238 = por %p236, %p237
      %s240 = sadd.s32 %s239, 1
      %p243 = scmp.eq.s32.totalorder %s32, 1
      %p244 = scmp.ne.s32.totalorder %s239, %s241
      %p245 = scmp.eq.s32.totalorder %s32, 0
      %p246 = por %p244, %p245
      %p247 = scmp.ne.s32.totalorder %s239, %s241
      %p248 = scmp.eq.s32.totalorder %s37, 1
      %p249 = por %p247, %p248
      %p250 = scmp.ne.s32.totalorder %s241, %s242
      %p251 = scmp.eq.s32.totalorder %s37, 0
      %p252 = por %p250, %p251
      %p253 = scmp.ne.s32.totalorder %s241, %s242
      %p254 = scmp.eq.s32.totalorder %s38, 1
      %p255 = por %p253, %p254
      %p257 = scmp.ne.s32.totalorder %s242, %s256
      %p258 = scmp.eq.s32.totalorder %s38, 0
      %p259 = por %p257, %p258
      %s261 = sadd.s32 %s260, 1
      %p264 = scmp.eq.s32.totalorder %s32, 1
      %p265 = scmp.ne.s32.totalorder %s260, %s262
      %p266 = scmp.eq.s32.totalorder %s32, 0
      %p267 = por %p265, %p266
      %p268 = scmp.ne.s32.totalorder %s260, %s262
      %p269 = scmp.eq.s32.totalorder %s37, 1
      %p270 = por %p268, %p269
      %p271 = scmp.ne.s32.totalorder %s262, %s263
      %p272 = scmp.eq.s32.totalorder %s37, 0
      %p273 = por %p271, %p272
      %p274 = scmp.ne.s32.totalorder %s262, %s263
      %p275 = scmp.eq.s32.totalorder %s38, 1
      %p276 = por %p274, %p275
      %p278 = scmp.ne.s32.totalorder %s263, %s277
      %p279 = scmp.eq.s32.totalorder %s38, 0
      %p280 = por %p278, %p279
      %s282 = sadd.s32 %s281, 1
      %p285 = scmp.eq.s32.totalorder %s32, 1
      %p286 = scmp.ne.s32.totalorder %s281, %s283
      %p287 = scmp.eq.s32.totalorder %s32, 0
      %p288 = por %p286, %p287
      %p289 = scmp.ne.s32.totalorder %s281, %s283
      %p290 = scmp.eq.s32.totalorder %s37, 1
      %p291 = por %p289, %p290
      %p292 = scmp.ne.s32.totalorder %s283, %s284
      %p293 = scmp.eq.s32.totalorder %s37, 0
      %p294 = por %p292, %p293
      %p295 = scmp.ne.s32.totalorder %s283, %s284
      %p296 = scmp.eq.s32.totalorder %s38, 1
      %p297 = por %p295, %p296
      %p299 = scmp.ne.s32.totalorder %s284, %s298
      %p300 = scmp.eq.s32.totalorder %s38, 0
      %p301 = por %p299, %p300
      %s302 = ssub.s32 %s32, %s39
      %p303 = scmp.eq.s32.totalorder %s302, 0
      %s305 = sadd.s32 %s304, 1
      %s306 = scalar_select %p303, %s304, %s305
      %p309 = pneg %p303
      %p310 = scmp.eq.s32.totalorder %s32, 1
      %p311 = por %p309, %p310
      %p312 = scmp.ne.s32.totalorder %s304, %s307
      %p313 = scmp.eq.s32.totalorder %s32, 0
      %p314 = por %p312, %p313
      %p315 = scmp.ne.s32.totalorder %s304, %s307
      %p316 = scmp.eq.s32.totalorder %s37, 1
      %p317 = por %p315, %p316
      %p318 = scmp.ne.s32.totalorder %s307, %s308
      %p319 = scmp.eq.s32.totalorder %s37, 0
      %p320 = por %p318, %p319
      %p321 = scmp.ne.s32.totalorder %s307, %s308
      %p322 = scmp.eq.s32.totalorder %s38, 1
      %p323 = por %p321, %p322
      %p325 = scmp.ne.s32.totalorder %s308, %s324
      %p326 = scmp.eq.s32.totalorder %s38, 0
      %p327 = por %p325, %p326
      %p328 = scmp.le.s32.totalorder 1, %s32
      %p329 = scmp.lt.s32.totalorder %s32, 3
      %p330 = pnand %p328, %p329
      %p331 = pneg %p330
      // Predicated region
      $region9: #{tpu_custom_call.1} parent=5 // pred_check
        _
      $region10: #{tpu_custom_call.1} parent=5 // pred_check_branch
        %333 = sbr.rel (%p330) target = $region12
      $region11: #{tpu_custom_call.1} parent=5 // pred_region
        %s334 = ssub.s32 %s32, 1
        // Predicated region
        $region13: #{tpu_custom_call.1} parent=11 // pred_check
          %p335 = pneg %p105
        $region14: #{tpu_custom_call.1} parent=11 // pred_check_branch
          %337 = sbr.rel (%p335) target = $region16
        $region15: #{tpu_custom_call.1} parent=11 // pred_region
          %s339 = ssub.s32 1024, 1024
          %340 = vsyncadd [#allocation6], %s339
          %s341 = sshll.u32 [#allocation7], 4
          %s342 = int_to_ptr.vmem [resolvable:$true] %s341
          %347 = dma.hbm_to_vmem [thread:$0]  %s2, 1024, %s342, [#allocation6], 64, 64, 4
        $region16: #{tpu_custom_call.1} parent=11 // pred_fallthru
          _
        // Predicated region
        $region17: #{tpu_custom_call.1} parent=11 // pred_check
          %p348 = pneg %p126
        $region18: #{tpu_custom_call.1} parent=11 // pred_check_branch
          %350 = sbr.rel (%p348) target = $region20
        $region19: #{tpu_custom_call.1} parent=11 // pred_region
          %s352 = ssub.s32 16, 16
          %353 = vsyncadd [#allocation9], %s352
          %s355 = sshll.u32 [#allocation8], 4
          %s356 = int_to_ptr.vmem [resolvable:$true] %s355
          %358 = dma.hbm_to_vmem [thread:$0]  %s3, 16, %s356, [#allocation9]
        $region20: #{tpu_custom_call.1} parent=11 // pred_fallthru
          _
        // Predicated region
        $region21: #{tpu_custom_call.1} parent=11 // pred_check
          %p359 = pneg %p147
        $region22: #{tpu_custom_call.1} parent=11 // pred_check_branch
          %361 = sbr.rel (%p359) target = $region24
        $region23: #{tpu_custom_call.1} parent=11 // pred_region
          %s363 = ssub.s32 64, 64
          %364 = vsyncadd [#allocation9], %s363
          %s366 = sshll.u32 [#allocation10], 4
          %s367 = int_to_ptr.vmem [resolvable:$true] %s366
          %369 = dma.hbm_to_vmem [thread:$0]  %s4, 64, %s367, [#allocation9]
        $region24: #{tpu_custom_call.1} parent=11 // pred_fallthru
          _
        // Predicated region
        $region25: #{tpu_custom_call.1} parent=11 // pred_check
          %p370 = pneg %p168
        $region26: #{tpu_custom_call.1} parent=11 // pred_check_branch
          %372 = sbr.rel (%p370) target = $region28
        $region27: #{tpu_custom_call.1} parent=11 // pred_region
          %s374 = ssub.s32 16, 16
          %375 = vsyncadd [#allocation12], %s374
          %s377 = sshll.u32 [#allocation11], 4
          %s378 = int_to_ptr.vmem [resolvable:$true] %s377
          %380 = dma.hbm_to_vmem [thread:$0]  %s5, 16, %s378, [#allocation12]
        $region28: #{tpu_custom_call.1} parent=11 // pred_fallthru
          _
        // Predicated region
        $region29: #{tpu_custom_call.1} parent=11 // pred_check
          %p381 = pneg %p189
        $region30: #{tpu_custom_call.1} parent=11 // pred_check_branch
          %383 = sbr.rel (%p381) target = $region32
        $region31: #{tpu_custom_call.1} parent=11 // pred_region
          %s385 = ssub.s32 512, 512
          %386 = vsyncadd [#allocation12], %s385
          %s387 = sshll.u32 [#allocation13], 4
          %s388 = int_to_ptr.vmem [resolvable:$true] %s387
          %393 = dma.hbm_to_vmem [thread:$0]  %s6, 512, %s388, [#allocation12], 64, 64, 4
        $region32: #{tpu_custom_call.1} parent=11 // pred_fallthru
          _
        // Predicated region
        $region33: #{tpu_custom_call.1} parent=11 // pred_check
          %p394 = pneg %p210
        $region34: #{tpu_custom_call.1} parent=11 // pred_check_branch
          %396 = sbr.rel (%p394) target = $region36
        $region35: #{tpu_custom_call.1} parent=11 // pred_region
          %s398 = ssub.s32 16, 16
          %399 = vsyncadd [#allocation15], %s398
          %s401 = sshll.u32 [#allocation14], 4
          %s402 = int_to_ptr.vmem [resolvable:$true] %s401
          %404 = dma.hbm_to_vmem [thread:$0]  %s7, 16, %s402, [#allocation15]
        $region36: #{tpu_custom_call.1} parent=11 // pred_fallthru
          _
        // Predicated region
        $region37: #{tpu_custom_call.1} parent=11 // pred_check
          %p405 = pneg %p231
        $region38: #{tpu_custom_call.1} parent=11 // pred_check_branch
          %407 = sbr.rel (%p405) target = $region40
        $region39: #{tpu_custom_call.1} parent=11 // pred_region
          %s409 = ssub.s32 2048, 2048
          %410 = vsyncadd [#allocation15], %s409
          %s411 = sshll.u32 [#allocation16], 4
          %s412 = int_to_ptr.vmem [resolvable:$true] %s411
          %417 = dma.hbm_to_vmem [thread:$0]  %s8, 2048, %s412, [#allocation15], 64, 64, 4
        $region40: #{tpu_custom_call.1} parent=11 // pred_fallthru
          _
        // Predicated region
        $region41: #{tpu_custom_call.1} parent=11 // pred_check
          %p418 = pneg %p252
        $region42: #{tpu_custom_call.1} parent=11 // pred_check_branch
          %420 = sbr.rel (%p418) target = $region44
        $region43: #{tpu_custom_call.1} parent=11 // pred_region
          %s422 = ssub.s32 16, 16
          %423 = vsyncadd [#allocation18], %s422
          %s425 = sshll.u32 [#allocation17], 4
          %s426 = int_to_ptr.vmem [resolvable:$true] %s425
          %428 = dma.hbm_to_vmem [thread:$0]  %s9, 16, %s426, [#allocation18]
        $region44: #{tpu_custom_call.1} parent=11 // pred_fallthru
          _
        // Predicated region
        $region45: #{tpu_custom_call.1} parent=11 // pred_check
          %p429 = pneg %p273
        $region46: #{tpu_custom_call.1} parent=11 // pred_check_branch
          %431 = sbr.rel (%p429) target = $region48
        $region47: #{tpu_custom_call.1} parent=11 // pred_region
          %s433 = ssub.s32 16, 16
          %434 = vsyncadd [#allocation18], %s433
          %s436 = sshll.u32 [#allocation19], 4
          %s437 = int_to_ptr.vmem [resolvable:$true] %s436
          %439 = dma.hbm_to_vmem [thread:$0]  %s10, 16, %s437, [#allocation18]
        $region48: #{tpu_custom_call.1} parent=11 // pred_fallthru
          _
        // Predicated region
        $region49: #{tpu_custom_call.1} parent=11 // pred_check
          %p440 = pneg %p294
        $region50: #{tpu_custom_call.1} parent=11 // pred_check_branch
          %442 = sbr.rel (%p440) target = $region52
        $region51: #{tpu_custom_call.1} parent=11 // pred_region
          %s444 = ssub.s32 16, 16
          %445 = vsyncadd [#allocation21], %s444
          %s447 = sshll.u32 [#allocation20], 4
          %s448 = int_to_ptr.vmem [resolvable:$true] %s447
          %450 = dma.hbm_to_vmem [thread:$0]  %s11, 16, %s448, [#allocation21]
        $region52: #{tpu_custom_call.1} parent=11 // pred_fallthru
          _
      $region12: #{tpu_custom_call.1} parent=5 // pred_fallthru
        _
      %p451 = scmp.lt.s32.totalorder %s32, 2
      // Predicated region
      $region53: #{tpu_custom_call.1} parent=5 // pred_check
        %p452 = pneg %p451
      $region54: #{tpu_custom_call.1} parent=5 // pred_check_branch
        %454 = sbr.rel (%p452) target = $region56
      $region55: #{tpu_custom_call.1} parent=5 // pred_region
        // Predicated region
        $region57: #{tpu_custom_call.1} parent=55 // pred_check
          %p455 = pneg %p52
        $region58: #{tpu_custom_call.1} parent=55 // pred_check_branch
          %457 = sbr.rel (%p455) target = $region60
        $region59: #{tpu_custom_call.1} parent=55 // pred_region
          %s458 = sand.u32 %s42, 1
          %s459 = scalar_lea.sflag [#allocation3], %s458
          %s460 = sand.u32 %s42, 1
          %s461 = smul.addr %s460, 128
          %s462 = scalar_lea.vmem [#allocation2], %s461
          %s463 = smul.u32 16, %s32
          %s465 = ssub.s32 2048, 2048
          %466 = vsyncadd %s459, %s465
          %s467 = smul.addr %s463, 2
          %s468 = smul.addr %s467, 64
          %s469 = scalar_lea.hbm %s0, %s468
          %s470 = sshll.u32 %s462, 4
          %s471 = int_to_ptr.vmem [resolvable:$true] %s470
          %476 = dma.hbm_to_vmem [thread:$0]  %s469, 2048, %s471, %s459, 128, 128, 8
        $region60: #{tpu_custom_call.1} parent=55 // pred_fallthru
          _
        // Predicated region
        $region61: #{tpu_custom_call.1} parent=55 // pred_check
          %p477 = pneg %p78
        $region62: #{tpu_custom_call.1} parent=55 // pred_check_branch
          %479 = sbr.rel (%p477) target = $region64
        $region63: #{tpu_custom_call.1} parent=55 // pred_region
          %s480 = sand.u32 %s32, 1
          %s481 = scalar_lea.sflag [#allocation6], %s480
          %s482 = sand.u32 %s68, 1
          %s483 = smul.addr %s482, 64
          %s484 = scalar_lea.vmem [#allocation5], %s483
          %s485 = smul.u32 16, %s32
          %s487 = ssub.s32 1024, 1024
          %488 = vsyncadd %s481, %s487
          %s489 = smul.addr %s485, 64
          %s490 = scalar_lea.hbm %s1, %s489
          %s491 = sshll.u32 %s484, 4
          %s492 = int_to_ptr.vmem [resolvable:$true] %s491
          %497 = dma.hbm_to_vmem [thread:$0]  %s490, 1024, %s492, %s481, 64, 64, 4
        $region64: #{tpu_custom_call.1} parent=55 // pred_fallthru
          _
      $region56: #{tpu_custom_call.1} parent=5 // pred_fallthru
        _
      %p498 = scmp.le.s32.totalorder 1, %s32
      %p499 = scmp.lt.s32.totalorder %s32, 3
      %p500 = pnand %p498, %p499
      %p501 = pneg %p500
      // Predicated region
      $region65: #{tpu_custom_call.1} parent=5 // pred_check
        _
      $region66: #{tpu_custom_call.1} parent=5 // pred_check_branch
        %503 = sbr.rel (%p500) target = $region68
      $region67: #{tpu_custom_call.1} parent=5 // pred_region
        %s504 = ssub.s32 %s32, 1
        %s505 = sand.u32 %s45, 1
        %s506 = scalar_lea.sflag [#allocation3], %s505
        %s507 = sand.u32 %s45, 1
        %s508 = smul.addr %s507, 128
        %s509 = scalar_lea.vmem [#allocation2], %s508
        // Predicated region
        $region69: #{tpu_custom_call.1} parent=67 // pred_check
          %p510 = pneg %p58
        $region70: #{tpu_custom_call.1} parent=67 // pred_check_branch
          %512 = sbr.rel (%p510) target = $region72
        $region71: #{tpu_custom_call.1} parent=67 // pred_region
          %513 = dma.done %s506, 2048
        $region72: #{tpu_custom_call.1} parent=67 // pred_fallthru
          _
        %s514 = sand.u32 %s37, 1
        %s515 = scalar_lea.sflag [#allocation6], %s514
        %s516 = sand.u32 %s71, 1
        %s517 = smul.addr %s516, 64
        %s518 = scalar_lea.vmem [#allocation5], %s517
        // Predicated region
        $region73: #{tpu_custom_call.1} parent=67 // pred_check
          %p519 = pneg %p84
        $region74: #{tpu_custom_call.1} parent=67 // pred_check_branch
          %521 = sbr.rel (%p519) target = $region76
        $region75: #{tpu_custom_call.1} parent=67 // pred_region
          %522 = dma.done %s515, 1024
        $region76: #{tpu_custom_call.1} parent=67 // pred_fallthru
          _
        // Predicated region
        $region77: #{tpu_custom_call.1} parent=67 // pred_check
          %p523 = pneg %p105
        $region78: #{tpu_custom_call.1} parent=67 // pred_check_branch
          %525 = sbr.rel (%p523) target = $region80
        $region79: #{tpu_custom_call.1} parent=67 // pred_region
          %526 = dma.done [#allocation6], 1024
        $region80: #{tpu_custom_call.1} parent=67 // pred_fallthru
          _
        // Predicated region
        $region81: #{tpu_custom_call.1} parent=67 // pred_check
          %p527 = pneg %p126
        $region82: #{tpu_custom_call.1} parent=67 // pred_check_branch
          %529 = sbr.rel (%p527) target = $region84
        $region83: #{tpu_custom_call.1} parent=67 // pred_region
          %530 = dma.done [#allocation9], 16
        $region84: #{tpu_custom_call.1} parent=67 // pred_fallthru
          _
        // Predicated region
        $region85: #{tpu_custom_call.1} parent=67 // pred_check
          %p531 = pneg %p147
        $region86: #{tpu_custom_call.1} parent=67 // pred_check_branch
          %533 = sbr.rel (%p531) target = $region88
        $region87: #{tpu_custom_call.1} parent=67 // pred_region
          %534 = dma.done [#allocation9], 64
        $region88: #{tpu_custom_call.1} parent=67 // pred_fallthru
          _
        // Predicated region
        $region89: #{tpu_custom_call.1} parent=67 // pred_check
          %p535 = pneg %p168
        $region90: #{tpu_custom_call.1} parent=67 // pred_check_branch
          %537 = sbr.rel (%p535) target = $region92
        $region91: #{tpu_custom_call.1} parent=67 // pred_region
          %538 = dma.done [#allocation12], 16
        $region92: #{tpu_custom_call.1} parent=67 // pred_fallthru
          _
        // Predicated region
        $region93: #{tpu_custom_call.1} parent=67 // pred_check
          %p539 = pneg %p189
        $region94: #{tpu_custom_call.1} parent=67 // pred_check_branch
          %541 = sbr.rel (%p539) target = $region96
        $region95: #{tpu_custom_call.1} parent=67 // pred_region
          %542 = dma.done [#allocation12], 512
        $region96: #{tpu_custom_call.1} parent=67 // pred_fallthru
          _
        // Predicated region
        $region97: #{tpu_custom_call.1} parent=67 // pred_check
          %p543 = pneg %p210
        $region98: #{tpu_custom_call.1} parent=67 // pred_check_branch
          %545 = sbr.rel (%p543) target = $region100
        $region99: #{tpu_custom_call.1} parent=67 // pred_region
          %546 = dma.done [#allocation15], 16
        $region100: #{tpu_custom_call.1} parent=67 // pred_fallthru
          _
        // Predicated region
        $region101: #{tpu_custom_call.1} parent=67 // pred_check
          %p547 = pneg %p231
        $region102: #{tpu_custom_call.1} parent=67 // pred_check_branch
          %549 = sbr.rel (%p547) target = $region104
        $region103: #{tpu_custom_call.1} parent=67 // pred_region
          %550 = dma.done [#allocation15], 2048
        $region104: #{tpu_custom_call.1} parent=67 // pred_fallthru
          _
        // Predicated region
        $region105: #{tpu_custom_call.1} parent=67 // pred_check
          %p551 = pneg %p252
        $region106: #{tpu_custom_call.1} parent=67 // pred_check_branch
          %553 = sbr.rel (%p551) target = $region108
        $region107: #{tpu_custom_call.1} parent=67 // pred_region
          %554 = dma.done [#allocation18], 16
        $region108: #{tpu_custom_call.1} parent=67 // pred_fallthru
          _
        // Predicated region
        $region109: #{tpu_custom_call.1} parent=67 // pred_check
          %p555 = pneg %p273
        $region110: #{tpu_custom_call.1} parent=67 // pred_check_branch
          %557 = sbr.rel (%p555) target = $region112
        $region111: #{tpu_custom_call.1} parent=67 // pred_region
          %558 = dma.done [#allocation18], 16
        $region112: #{tpu_custom_call.1} parent=67 // pred_fallthru
          _
        // Predicated region
        $region113: #{tpu_custom_call.1} parent=67 // pred_check
          %p559 = pneg %p294
        $region114: #{tpu_custom_call.1} parent=67 // pred_check_branch
          %561 = sbr.rel (%p559) target = $region116
        $region115: #{tpu_custom_call.1} parent=67 // pred_region
          %562 = dma.done [#allocation21], 16
        $region116: #{tpu_custom_call.1} parent=67 // pred_fallthru
          _
        %s563 = sand.u32 %s45, 1
        %s564 = scalar_lea.sflag [#allocation3], %s563
        %s565 = sand.u32 %s45, 1
        %s566 = smul.addr %s565, 128
        %s567 = scalar_lea.vmem [#allocation2], %s566
        %p568 = pneg %p58
        %p569 = pneg %p55
        %s570 = sand.u32 %s37, 1
        %s571 = scalar_lea.sflag [#allocation6], %s570
        %s572 = sand.u32 %s71, 1
        %s573 = smul.addr %s572, 64
        %s574 = scalar_lea.vmem [#allocation5], %s573
        %p575 = pneg %p84
        %p576 = pneg %p81
        %p577 = pneg %p105
        %p578 = pneg %p102
        %p579 = pneg %p126
        %p580 = pneg %p123
        %p581 = pneg %p147
        %p582 = pneg %p144
        %p583 = pneg %p168
        %p584 = pneg %p165
        %p585 = pneg %p189
        %p586 = pneg %p186
        %p587 = pneg %p210
        %p588 = pneg %p207
        %p589 = pneg %p231
        %p590 = pneg %p228
        %p591 = pneg %p252
        %p592 = pneg %p249
        %p593 = pneg %p273
        %p594 = pneg %p270
        %p595 = pneg %p294
        %p596 = pneg %p291
        %p597 = pneg %p320
        %p598 = pneg %p317
        %s599 = sand.u32 %s307, 1
        %s600 = scalar_lea.sflag [#allocation4], %s599
        %s601 = sand.u32 %s307, 1
        %s602 = smul.addr %s601, 128
        %s603 = scalar_lea.vmem [#allocation22], %s602
        %s604 = smul.u32 16, %s37
        %s605 = smul.u32 16, %s37
        %s606 = smul.u32 16, %s37
        %v608 = vld [vmem:[%s509] sm:$0xf]
        %v609 = vld [vmem:[%s509 + $0x8] sm:$0xf]
        %v610 = vld [vmem:[%s509 + $0x10] sm:$0xf]
        %v611 = vld [vmem:[%s509 + $0x18] sm:$0xf]
        %v612 = vld [vmem:[%s509 + $0x20] sm:$0xf]
        %v613 = vld [vmem:[%s509 + $0x28] sm:$0xf]
        %v614 = vld [vmem:[%s509 + $0x30] sm:$0xf]
        %v615 = vld [vmem:[%s509 + $0x38] sm:$0xf]
        %v616 = vld [vmem:[%s509 + $0x40] sm:$0xf]
        %v617 = vld [vmem:[%s509 + $0x48] sm:$0xf]
        %v618 = vld [vmem:[%s509 + $0x50] sm:$0xf]
        %v619 = vld [vmem:[%s509 + $0x58] sm:$0xf]
        %v620 = vld [vmem:[%s509 + $0x60] sm:$0xf]
        %v621 = vld [vmem:[%s509 + $0x68] sm:$0xf]
        %v622 = vld [vmem:[%s509 + $0x70] sm:$0xf]
        %v623 = vld [vmem:[%s509 + $0x78] sm:$0xf]
        %v624 = vld [vmem:[#allocation7] sm:$0xf]
        %v625 = vld [vmem:[#allocation7 + $0x4] sm:$0xf]
        %v626 = vld [vmem:[#allocation7 + $0x8] sm:$0xf]
        %v627 = vld [vmem:[#allocation7 + $0xc] sm:$0xf]
        %v628 = vld [vmem:[#allocation7 + $0x10] sm:$0xf]
        %v629 = vld [vmem:[#allocation7 + $0x14] sm:$0xf]
        %v630 = vld [vmem:[#allocation7 + $0x18] sm:$0xf]
        %v631 = vld [vmem:[#allocation7 + $0x1c] sm:$0xf]
        %v632 = vld [vmem:[#allocation7 + $0x20] sm:$0xf]
        %v633 = vld [vmem:[#allocation7 + $0x24] sm:$0xf]
        %v634 = vld [vmem:[#allocation7 + $0x28] sm:$0xf]
        %v635 = vld [vmem:[#allocation7 + $0x2c] sm:$0xf]
        %v636 = vld [vmem:[#allocation7 + $0x30] sm:$0xf]
        %v637 = vld [vmem:[#allocation7 + $0x34] sm:$0xf]
        %v638 = vld [vmem:[#allocation7 + $0x38] sm:$0xf]
        %v639 = vld [vmem:[#allocation7 + $0x3c] sm:$0xf]
        %v640 = vld [vmem:[#allocation8] sm:$0x1]
        %v642 = vlaneseq
        %v643 = vshrl.u32 %v642, 7
        %v644 = vsub.s32 0, %v643
        %v645 = vrot.slane %v640, %v644
        %v663 = vunpack.c.l.b16 %v608
        %v664 = vunpack.c.l.b16 %v609
        %v665 = vunpack.c.l.b16 %v610
        %v666 = vunpack.c.l.b16 %v611
        %v667 = vunpack.c.l.b16 %v612
        %v668 = vunpack.c.l.b16 %v613
        %v669 = vunpack.c.l.b16 %v614
        %v670 = vunpack.c.l.b16 %v615
        %v671 = vunpack.c.l.b16 %v616
        %v672 = vunpack.c.l.b16 %v617
        %v673 = vunpack.c.l.b16 %v618
        %v674 = vunpack.c.l.b16 %v619
        %v675 = vunpack.c.l.b16 %v620
        %v676 = vunpack.c.l.b16 %v621
        %v677 = vunpack.c.l.b16 %v622
        %v678 = vunpack.c.l.b16 %v623
        %v679 = vpack.c.b16 %v664, %v663
        %v680 = vpack.c.b16 %v666, %v665
        %v681 = vpack.c.b16 %v668, %v667
        %v682 = vpack.c.b16 %v670, %v669
        %v683 = vpack.c.b16 %v672, %v671
        %v684 = vpack.c.b16 %v674, %v673
        %v685 = vpack.c.b16 %v676, %v675
        %v686 = vpack.c.b16 %v678, %v677
        %v711 = vunpack.c.l.b16 %v624
        %v712 = vunpack.c.l.b16 %v625
        %v713 = vunpack.c.l.b16 %v626
        %v714 = vunpack.c.l.b16 %v627
        %v715 = vunpack.c.l.b16 %v628
        %v716 = vunpack.c.l.b16 %v629
        %v717 = vunpack.c.l.b16 %v630
        %v718 = vunpack.c.l.b16 %v631
        %v719 = vunpack.c.l.b16 %v632
        %v720 = vunpack.c.l.b16 %v633
        %v721 = vunpack.c.l.b16 %v634
        %v722 = vunpack.c.l.b16 %v635
        %v723 = vunpack.c.l.b16 %v636
        %v724 = vunpack.c.l.b16 %v637
        %v725 = vunpack.c.l.b16 %v638
        %v726 = vunpack.c.l.b16 %v639
        %v727 = vpack.c.b16 %v712, %v711
        %v728 = vpack.c.b16 %v714, %v713
        %v729 = vpack.c.b16 %v716, %v715
        %v730 = vpack.c.b16 %v718, %v717
        %v731 = vpack.c.b16 %v720, %v719
        %v732 = vpack.c.b16 %v722, %v721
        %v733 = vpack.c.b16 %v724, %v723
        %v734 = vpack.c.b16 %v726, %v725
        %743 = vmatprep.subr.bf16.mxu0 0
        %744 = vmatpush1.bf16.msra.mxu0 %v727
        %745 = vmatprep.subr.bf16.mxu0 0
        %746 = vmatpush1.bf16.msra.mxu0 %v728
        %747 = vmatprep.subr.bf16.mxu0 0
        %748 = vmatpush1.bf16.msra.mxu0 %v729
        %749 = vmatprep.subr.bf16.mxu0 0
        %750 = vmatpush1.bf16.msra.mxu0 %v730
        %751 = vmatprep.subr.bf16.mxu0 0
        %752 = vmatpush1.bf16.msra.mxu0 %v731
        %753 = vmatprep.subr.bf16.mxu0 0
        %754 = vmatpush1.bf16.msra.mxu0 %v732
        %755 = vmatprep.subr.bf16.mxu0 0
        %756 = vmatpush1.bf16.msra.mxu0 %v733
        %757 = vmatprep.subr.bf16.mxu0 0
        %758 = vmatpush1.bf16.msra.mxu0 %v734
        %759 = vmatprep.subr.bf16.mxu0 0
        %760 = vmatpush1.bf16.msra.mxu0 0
        %761 = vmatprep.subr.bf16.mxu0 0
        %762 = vmatpush1.bf16.msra.mxu0 0
        %763 = vmatprep.subr.bf16.mxu0 0
        %764 = vmatpush1.bf16.msra.mxu0 0
        %765 = vmatprep.subr.bf16.mxu0 0
        %766 = vmatpush1.bf16.msra.mxu0 0
        %767 = vmatprep.subr.bf16.mxu0 0
        %768 = vmatpush1.bf16.msra.mxu0 0
        %769 = vmatprep.subr.bf16.mxu0 0
        %770 = vmatpush1.bf16.msra.mxu0 0
        %771 = vmatprep.subr.bf16.mxu0 0
        %772 = vmatpush1.bf16.msra.mxu0 0
        %773 = vmatprep.subr.bf16.mxu0 0
        %774 = vmatpush1.bf16.msra.mxu0 0
        %775 = vmatprep.mubr.bf16.mxu0 0
        %776 = vmatmul.mubr.bf16.gmra.mrb[0].mxu0 %v679
        %v777 = vpop.f32.mrb[0].mxu0
        %v778 = vadd.f32 %v645, %v777
        %v779 = vpop.f32.mrb[0].mxu0
        %v780 = vpop.f32.mrb[0].mxu0
        %v781 = vadd.f32 %v645, %v780
        %v782 = vpop.f32.mrb[0].mxu0
        %783 = vmatprep.mubr.bf16.mxu0 0
        %784 = vmatmul.mubr.bf16.gmra.mrb[0].mxu0 %v680
        %v785 = vpop.f32.mrb[0].mxu0
        %v786 = vadd.f32 %v645, %v785
        %v787 = vpop.f32.mrb[0].mxu0
        %v788 = vpop.f32.mrb[0].mxu0
        %v789 = vadd.f32 %v645, %v788
        %v790 = vpop.f32.mrb[0].mxu0
        %791 = vmatprep.mubr.bf16.mxu0 0
        %792 = vmatmul.mubr.bf16.gmra.mrb[0].mxu0 %v681
        %v793 = vpop.f32.mrb[0].mxu0
        %v794 = vadd.f32 %v645, %v793
        %v795 = vpop.f32.mrb[0].mxu0
        %v796 = vpop.f32.mrb[0].mxu0
        %v797 = vadd.f32 %v645, %v796
        %v798 = vpop.f32.mrb[0].mxu0
        %799 = vmatprep.mubr.bf16.mxu0 0
        %800 = vmatmul.mubr.bf16.gmra.mrb[0].mxu0 %v682
        %v801 = vpop.f32.mrb[0].mxu0
        %v802 = vadd.f32 %v645, %v801
        %v803 = vpop.f32.mrb[0].mxu0
        %v804 = vpop.f32.mrb[0].mxu0
        %v805 = vadd.f32 %v645, %v804
        %v806 = vpop.f32.mrb[0].mxu0
        %807 = vmatprep.mubr.bf16.mxu0 0
        %808 = vmatmul.mubr.bf16.gmra.mrb[0].mxu0 %v683
        %v809 = vpop.f32.mrb[0].mxu0
        %v810 = vadd.f32 %v645, %v809
        %v811 = vpop.f32.mrb[0].mxu0
        %v812 = vpop.f32.mrb[0].mxu0
        %v813 = vadd.f32 %v645, %v812
        %v814 = vpop.f32.mrb[0].mxu0
        %815 = vmatprep.mubr.bf16.mxu0 0
        %816 = vmatmul.mubr.bf16.gmra.mrb[0].mxu0 %v684
        %v817 = vpop.f32.mrb[0].mxu0
        %v818 = vadd.f32 %v645, %v817
        %v819 = vpop.f32.mrb[0].mxu0
        %v820 = vpop.f32.mrb[0].mxu0
        %v821 = vadd.f32 %v645, %v820
        %v822 = vpop.f32.mrb[0].mxu0
        %823 = vmatprep.mubr.bf16.mxu0 0
        %824 = vmatmul.mubr.bf16.gmra.mrb[0].mxu0 %v685
        %v825 = vpop.f32.mrb[0].mxu0
        %v826 = vadd.f32 %v645, %v825
        %v827 = vpop.f32.mrb[0].mxu0
        %v828 = vpop.f32.mrb[0].mxu0
        %v829 = vadd.f32 %v645, %v828
        %v830 = vpop.f32.mrb[0].mxu0
        %831 = vmatprep.mubr.bf16.mxu0 0
        %832 = vmatmul.mubr.bf16.gmra.mrb[0].mxu0 %v686
        %v833 = vpop.f32.mrb[0].mxu0
        %v834 = vadd.f32 %v645, %v833
        %v835 = vpop.f32.mrb[0].mxu0
        %v836 = vpop.f32.mrb[0].mxu0
        %v837 = vadd.f32 %v645, %v836
        %v838 = vpop.f32.mrb[0].mxu0
        %839 = vdwg.mxu0
        %v840 = vld [vmem:[%s509 + $0x4] sm:$0xf]
        %v841 = vld [vmem:[%s509 + $0xc] sm:$0xf]
        %v842 = vld [vmem:[%s509 + $0x14] sm:$0xf]
        %v843 = vld [vmem:[%s509 + $0x1c] sm:$0xf]
        %v844 = vld [vmem:[%s509 + $0x24] sm:$0xf]
        %v845 = vld [vmem:[%s509 + $0x2c] sm:$0xf]
        %v846 = vld [vmem:[%s509 + $0x34] sm:$0xf]
        %v847 = vld [vmem:[%s509 + $0x3c] sm:$0xf]
        %v848 = vld [vmem:[%s509 + $0x44] sm:$0xf]
        %v849 = vld [vmem:[%s509 + $0x4c] sm:$0xf]
        %v850 = vld [vmem:[%s509 + $0x54] sm:$0xf]
        %v851 = vld [vmem:[%s509 + $0x5c] sm:$0xf]
        %v852 = vld [vmem:[%s509 + $0x64] sm:$0xf]
        %v853 = vld [vmem:[%s509 + $0x6c] sm:$0xf]
        %v854 = vld [vmem:[%s509 + $0x74] sm:$0xf]
        %v855 = vld [vmem:[%s509 + $0x7c] sm:$0xf]
        %v856 = vld [vmem:[#allocation10] sm:$0xf]
        %v857 = vld [vmem:[#allocation11] sm:$0x1]
        %v859 = vlaneseq
        %v860 = vshrl.u32 %v859, 7
        %v861 = vsub.s32 0, %v860
        %v862 = vrot.slane %v857, %v861
        %v880 = vunpack.c.l.b16 %v840
        %v881 = vunpack.c.l.b16 %v841
        %v882 = vunpack.c.l.b16 %v842
        %v883 = vunpack.c.l.b16 %v843
        %v884 = vunpack.c.l.b16 %v844
        %v885 = vunpack.c.l.b16 %v845
        %v886 = vunpack.c.l.b16 %v846
        %v887 = vunpack.c.l.b16 %v847
        %v888 = vunpack.c.l.b16 %v848
        %v889 = vunpack.c.l.b16 %v849
        %v890 = vunpack.c.l.b16 %v850
        %v891 = vunpack.c.l.b16 %v851
        %v892 = vunpack.c.l.b16 %v852
        %v893 = vunpack.c.l.b16 %v853
        %v894 = vunpack.c.l.b16 %v854
        %v895 = vunpack.c.l.b16 %v855
        %v896 = vpack.c.b16 %v881, %v880
        %v897 = vpack.c.b16 %v883, %v882
        %v898 = vpack.c.b16 %v885, %v884
        %v899 = vpack.c.b16 %v887, %v886
        %v900 = vpack.c.b16 %v889, %v888
        %v901 = vpack.c.b16 %v891, %v890
        %v902 = vpack.c.b16 %v893, %v892
        %v903 = vpack.c.b16 %v895, %v894
        %vm904 = vcmask 64512
        %v906 = vsel %vm904, %v896, 0
        %v909 = vsel %vm904, %v897, 0
        %v912 = vsel %vm904, %v898, 0
        %v915 = vsel %vm904, %v899, 0
        %v918 = vsel %vm904, %v900, 0
        %v921 = vsel %vm904, %v901, 0
        %v924 = vsel %vm904, %v902, 0
        %v927 = vsel %vm904, %v903, 0
        %vm929 = vcmask 1043456
        %v931 = vsel %vm929, %v856, 0
        %933 = vmatprep.subr.bf16.mxu0 0
        %934 = vmatpush1.bf16.msra.mxu0 %v931
        %935 = vmatprep.subr.bf16.mxu0 0
        %936 = vmatpush1.bf16.msra.mxu0 0
        %937 = vmatprep.subr.bf16.mxu0 0
        %938 = vmatpush1.bf16.msra.mxu0 0
        %939 = vmatprep.subr.bf16.mxu0 0
        %940 = vmatpush1.bf16.msra.mxu0 0
        %941 = vmatprep.subr.bf16.mxu0 0
        %942 = vmatpush1.bf16.msra.mxu0 0
        %943 = vmatprep.subr.bf16.mxu0 0
        %944 = vmatpush1.bf16.msra.mxu0 0
        %945 = vmatprep.subr.bf16.mxu0 0
        %946 = vmatpush1.bf16.msra.mxu0 0
        %947 = vmatprep.subr.bf16.mxu0 0
        %948 = vmatpush1.bf16.msra.mxu0 0
        %949 = vmatprep.subr.bf16.mxu0 0
        %950 = vmatpush1.bf16.msra.mxu0 0
        %951 = vmatprep.subr.bf16.mxu0 0
        %952 = vmatpush1.bf16.msra.mxu0 0
        %953 = vmatprep.subr.bf16.mxu0 0
        %954 = vmatpush1.bf16.msra.mxu0 0
        %955 = vmatprep.subr.bf16.mxu0 0
        %956 = vmatpush1.bf16.msra.mxu0 0
        %957 = vmatprep.subr.bf16.mxu0 0
        %958 = vmatpush1.bf16.msra.mxu0 0
        %959 = vmatprep.subr.bf16.mxu0 0
        %960 = vmatpush1.bf16.msra.mxu0 0
        %961 = vmatprep.subr.bf16.mxu0 0
        %962 = vmatpush1.bf16.msra.mxu0 0
        %963 = vmatprep.subr.bf16.mxu0 0
        %964 = vmatpush1.bf16.msra.mxu0 0
        %965 = vmatprep.mubr.bf16.mxu0 0
        %966 = vmatmul.mubr.bf16.gmra.mrb[0].mxu0 %v906
        %v967 = vpop.f32.mrb[0].mxu0
        %v968 = vadd.f32 %v862, %v967
        %v969 = vpop.f32.mrb[0].mxu0
        %v970 = vpop.f32.mrb[0].mxu0
        %v971 = vadd.f32 %v862, %v970
        %v972 = vpop.f32.mrb[0].mxu0
        %973 = vmatprep.mubr.bf16.mxu0 0
        %974 = vmatmul.mubr.bf16.gmra.mrb[0].mxu0 %v909
        %v975 = vpop.f32.mrb[0].mxu0
        %v976 = vadd.f32 %v862, %v975
        %v977 = vpop.f32.mrb[0].mxu0
        %v978 = vpop.f32.mrb[0].mxu0
        %v979 = vadd.f32 %v862, %v978
        %v980 = vpop.f32.mrb[0].mxu0
        %981 = vmatprep.mubr.bf16.mxu0 0
        %982 = vmatmul.mubr.bf16.gmra.mrb[0].mxu0 %v912
        %v983 = vpop.f32.mrb[0].mxu0
        %v984 = vadd.f32 %v862, %v983
        %v985 = vpop.f32.mrb[0].mxu0
        %v986 = vpop.f32.mrb[0].mxu0
        %v987 = vadd.f32 %v862, %v986
        %v988 = vpop.f32.mrb[0].mxu0
        %989 = vmatprep.mubr.bf16.mxu0 0
        %990 = vmatmul.mubr.bf16.gmra.mrb[0].mxu0 %v915
        %v991 = vpop.f32.mrb[0].mxu0
        %v992 = vadd.f32 %v862, %v991
        %v993 = vpop.f32.mrb[0].mxu0
        %v994 = vpop.f32.mrb[0].mxu0
        %v995 = vadd.f32 %v862, %v994
        %v996 = vpop.f32.mrb[0].mxu0
        %997 = vmatprep.mubr.bf16.mxu0 0
        %998 = vmatmul.mubr.bf16.gmra.mrb[0].mxu0 %v918
        %v999 = vpop.f32.mrb[0].mxu0
        %v1000 = vadd.f32 %v862, %v999
        %v1001 = vpop.f32.mrb[0].mxu0
        %v1002 = vpop.f32.mrb[0].mxu0
        %v1003 = vadd.f32 %v862, %v1002
        %v1004 = vpop.f32.mrb[0].mxu0
        %1005 = vmatprep.mubr.bf16.mxu0 0
        %1006 = vmatmul.mubr.bf16.gmra.mrb[0].mxu0 %v921
        %v1007 = vpop.f32.mrb[0].mxu0
        %v1008 = vadd.f32 %v862, %v1007
        %v1009 = vpop.f32.mrb[0].mxu0
        %v1010 = vpop.f32.mrb[0].mxu0
        %v1011 = vadd.f32 %v862, %v1010
        %v1012 = vpop.f32.mrb[0].mxu0
        %1013 = vmatprep.mubr.bf16.mxu0 0
        %1014 = vmatmul.mubr.bf16.gmra.mrb[0].mxu0 %v924
        %v1015 = vpop.f32.mrb[0].mxu0
        %v1016 = vadd.f32 %v862, %v1015
        %v1017 = vpop.f32.mrb[0].mxu0
        %v1018 = vpop.f32.mrb[0].mxu0
        %v1019 = vadd.f32 %v862, %v1018
        %v1020 = vpop.f32.mrb[0].mxu0
        %1021 = vmatprep.mubr.bf16.mxu0 0
        %1022 = vmatmul.mubr.bf16.gmra.mrb[0].mxu0 %v927
        %v1023 = vpop.f32.mrb[0].mxu0
        %v1024 = vadd.f32 %v862, %v1023
        %v1025 = vpop.f32.mrb[0].mxu0
        %v1026 = vpop.f32.mrb[0].mxu0
        %v1027 = vadd.f32 %v862, %v1026
        %v1028 = vpop.f32.mrb[0].mxu0
        %1029 = vdwg.mxu0
        %v1030 = vmax.f32 %v968, 0.0
        %v1031 = vmax.f32 %v971, 0.0
        %v1032 = vmax.f32 %v976, 0.0
        %v1033 = vmax.f32 %v979, 0.0
        %v1034 = vmax.f32 %v984, 0.0
        %v1035 = vmax.f32 %v987, 0.0
        %v1036 = vmax.f32 %v992, 0.0
        %v1037 = vmax.f32 %v995, 0.0
        %v1038 = vmax.f32 %v1000, 0.0
        %v1039 = vmax.f32 %v1003, 0.0
        %v1040 = vmax.f32 %v1008, 0.0
        %v1041 = vmax.f32 %v1011, 0.0
        %v1042 = vmax.f32 %v1016, 0.0
        %v1043 = vmax.f32 %v1019, 0.0
        %v1044 = vmax.f32 %v1024, 0.0
        %v1045 = vmax.f32 %v1027, 0.0
        %v1046 = vpack.c.bf16 %v1031, %v1030
        %v1047 = vpack.c.bf16 %v1033, %v1032
        %v1048 = vpack.c.bf16 %v1035, %v1034
        %v1049 = vpack.c.bf16 %v1037, %v1036
        %v1050 = vpack.c.bf16 %v1039, %v1038
        %v1051 = vpack.c.bf16 %v1041, %v1040
        %v1052 = vpack.c.bf16 %v1043, %v1042
        %v1053 = vpack.c.bf16 %v1045, %v1044
        %v1054 = vld [vmem:[#allocation13] sm:$0xf]
        %v1055 = vld [vmem:[#allocation13 + $0x4] sm:$0xf]
        %v1056 = vld [vmem:[#allocation13 + $0x8] sm:$0xf]
        %v1057 = vld [vmem:[#allocation13 + $0xc] sm:$0xf]
        %v1058 = vld [vmem:[#allocation13 + $0x10] sm:$0xf]
        %v1059 = vld [vmem:[#allocation13 + $0x14] sm:$0xf]
        %v1060 = vld [vmem:[#allocation13 + $0x18] sm:$0xf]
        %v1061 = vld [vmem:[#allocation13 + $0x1c] sm:$0xf]
        %v1062 = vld [vmem:[#allocation14] sm:$0x1]
        %v1064 = vlaneseq
        %v1065 = vshrl.u32 %v1064, 7
        %v1066 = vsub.s32 0, %v1065
        %v1067 = vrot.slane %v1062, %v1066
        %v1077 = vunpack.c.l.b16 %v1054
        %v1078 = vunpack.c.l.b16 %v1055
        %v1079 = vunpack.c.l.b16 %v1056
        %v1080 = vunpack.c.l.b16 %v1057
        %v1081 = vunpack.c.l.b16 %v1058
        %v1082 = vunpack.c.l.b16 %v1059
        %v1083 = vunpack.c.l.b16 %v1060
        %v1084 = vunpack.c.l.b16 %v1061
        %v1085 = vpack.c.b16 %v1078, %v1077
        %v1086 = vpack.c.b16 %v1080, %v1079
        %v1087 = vpack.c.b16 %v1082, %v1081
        %v1088 = vpack.c.b16 %v1084, %v1083
        %vm1093 = vcmask 523264
        %v1095 = vsel %vm1093, %v1046, 0
        %v1098 = vsel %vm1093, %v1047, 0
        %v1101 = vsel %vm1093, %v1048, 0
        %v1104 = vsel %vm1093, %v1049, 0
        %v1107 = vsel %vm1093, %v1050, 0
        %v1110 = vsel %vm1093, %v1051, 0
        %v1113 = vsel %vm1093, %v1052, 0
        %v1116 = vsel %vm1093, %v1053, 0
        %1118 = vmatprep.subr.bf16.mxu0 0
        %1119 = vmatpush1.bf16.msra.mxu0 %v1085
        %1120 = vmatprep.subr.bf16.mxu0 0
        %1121 = vmatpush1.bf16.msra.mxu0 %v1086
        %1122 = vmatprep.subr.bf16.mxu0 0
        %1123 = vmatpush1.bf16.msra.mxu0 %v1087
        %1124 = vmatprep.subr.bf16.mxu0 0
        %1125 = vmatpush1.bf16.msra.mxu0 %v1088
        %1126 = vmatprep.subr.bf16.mxu0 0
        %1127 = vmatpush1.bf16.msra.mxu0 0
        %1128 = vmatprep.subr.bf16.mxu0 0
        %1129 = vmatpush1.bf16.msra.mxu0 0
        %1130 = vmatprep.subr.bf16.mxu0 0
        %1131 = vmatpush1.bf16.msra.mxu0 0
        %1132 = vmatprep.subr.bf16.mxu0 0
        %1133 = vmatpush1.bf16.msra.mxu0 0
        %1134 = vmatprep.subr.bf16.mxu0 0
        %1135 = vmatpush1.bf16.msra.mxu0 0
        %1136 = vmatprep.subr.bf16.mxu0 0
        %1137 = vmatpush1.bf16.msra.mxu0 0
        %1138 = vmatprep.subr.bf16.mxu0 0
        %1139 = vmatpush1.bf16.msra.mxu0 0
        %1140 = vmatprep.subr.bf16.mxu0 0
        %1141 = vmatpush1.bf16.msra.mxu0 0
        %1142 = vmatprep.subr.bf16.mxu0 0
        %1143 = vmatpush1.bf16.msra.mxu0 0
        %1144 = vmatprep.subr.bf16.mxu0 0
        %1145 = vmatpush1.bf16.msra.mxu0 0
        %1146 = vmatprep.subr.bf16.mxu0 0
        %1147 = vmatpush1.bf16.msra.mxu0 0
        %1148 = vmatprep.subr.bf16.mxu0 0
        %1149 = vmatpush1.bf16.msra.mxu0 0
        %1150 = vmatprep.mubr.bf16.mxu0 0
        %1151 = vmatmul.mubr.bf16.gmra.mrb[0].mxu0 %v1095
        %v1152 = vpop.f32.mrb[0].mxu0
        %v1153 = vadd.f32 %v1067, %v1152
        %v1154 = vpop.f32.mrb[0].mxu0
        %v1155 = vpop.f32.mrb[0].mxu0
        %v1156 = vadd.f32 %v1067, %v1155
        %v1157 = vpop.f32.mrb[0].mxu0
        %1158 = vmatprep.mubr.bf16.mxu0 0
        %1159 = vmatmul.mubr.bf16.gmra.mrb[0].mxu0 %v1098
        %v1160 = vpop.f32.mrb[0].mxu0
        %v1161 = vadd.f32 %v1067, %v1160
        %v1162 = vpop.f32.mrb[0].mxu0
        %v1163 = vpop.f32.mrb[0].mxu0
        %v1164 = vadd.f32 %v1067, %v1163
        %v1165 = vpop.f32.mrb[0].mxu0
        %1166 = vmatprep.mubr.bf16.mxu0 0
        %1167 = vmatmul.mubr.bf16.gmra.mrb[0].mxu0 %v1101
        %v1168 = vpop.f32.mrb[0].mxu0
        %v1169 = vadd.f32 %v1067, %v1168
        %v1170 = vpop.f32.mrb[0].mxu0
        %v1171 = vpop.f32.mrb[0].mxu0
        %v1172 = vadd.f32 %v1067, %v1171
        %v1173 = vpop.f32.mrb[0].mxu0
        %1174 = vmatprep.mubr.bf16.mxu0 0
        %1175 = vmatmul.mubr.bf16.gmra.mrb[0].mxu0 %v1104
        %v1176 = vpop.f32.mrb[0].mxu0
        %v1177 = vadd.f32 %v1067, %v1176
        %v1178 = vpop.f32.mrb[0].mxu0
        %v1179 = vpop.f32.mrb[0].mxu0
        %v1180 = vadd.f32 %v1067, %v1179
        %v1181 = vpop.f32.mrb[0].mxu0
        %1182 = vmatprep.mubr.bf16.mxu0 0
        %1183 = vmatmul.mubr.bf16.gmra.mrb[0].mxu0 %v1107
        %v1184 = vpop.f32.mrb[0].mxu0
        %v1185 = vadd.f32 %v1067, %v1184
        %v1186 = vpop.f32.mrb[0].mxu0
        %v1187 = vpop.f32.mrb[0].mxu0
        %v1188 = vadd.f32 %v1067, %v1187
        %v1189 = vpop.f32.mrb[0].mxu0
        %1190 = vmatprep.mubr.bf16.mxu0 0
        %1191 = vmatmul.mubr.bf16.gmra.mrb[0].mxu0 %v1110
        %v1192 = vpop.f32.mrb[0].mxu0
        %v1193 = vadd.f32 %v1067, %v1192
        %v1194 = vpop.f32.mrb[0].mxu0
        %v1195 = vpop.f32.mrb[0].mxu0
        %v1196 = vadd.f32 %v1067, %v1195
        %v1197 = vpop.f32.mrb[0].mxu0
        %1198 = vmatprep.mubr.bf16.mxu0 0
        %1199 = vmatmul.mubr.bf16.gmra.mrb[0].mxu0 %v1113
        %v1200 = vpop.f32.mrb[0].mxu0
        %v1201 = vadd.f32 %v1067, %v1200
        %v1202 = vpop.f32.mrb[0].mxu0
        %v1203 = vpop.f32.mrb[0].mxu0
        %v1204 = vadd.f32 %v1067, %v1203
        %v1205 = vpop.f32.mrb[0].mxu0
        %1206 = vmatprep.mubr.bf16.mxu0 0
        %1207 = vmatmul.mubr.bf16.gmra.mrb[0].mxu0 %v1116
        %v1208 = vpop.f32.mrb[0].mxu0
        %v1209 = vadd.f32 %v1067, %v1208
        %v1210 = vpop.f32.mrb[0].mxu0
        %v1211 = vpop.f32.mrb[0].mxu0
        %v1212 = vadd.f32 %v1067, %v1211
        %v1213 = vpop.f32.mrb[0].mxu0
        %1214 = vdwg.mxu0
        %v1215 = vpack.c.bf16 %v781, %v778
        %v1216 = vpack.c.bf16 %v789, %v786
        %v1217 = vpack.c.bf16 %v797, %v794
        %v1218 = vpack.c.bf16 %v805, %v802
        %v1219 = vpack.c.bf16 %v813, %v810
        %v1220 = vpack.c.bf16 %v821, %v818
        %v1221 = vpack.c.bf16 %v829, %v826
        %v1222 = vpack.c.bf16 %v837, %v834
        %v1223 = vld [vmem:[%s518] sm:$0xf]
        %v1224 = vld [vmem:[%s518 + $0x4] sm:$0xf]
        %v1225 = vld [vmem:[%s518 + $0x8] sm:$0xf]
        %v1226 = vld [vmem:[%s518 + $0xc] sm:$0xf]
        %v1227 = vld [vmem:[%s518 + $0x10] sm:$0xf]
        %v1228 = vld [vmem:[%s518 + $0x14] sm:$0xf]
        %v1229 = vld [vmem:[%s518 + $0x18] sm:$0xf]
        %v1230 = vld [vmem:[%s518 + $0x1c] sm:$0xf]
        %v1231 = vld [vmem:[%s518 + $0x20] sm:$0xf]
        %v1232 = vld [vmem:[%s518 + $0x24] sm:$0xf]
        %v1233 = vld [vmem:[%s518 + $0x28] sm:$0xf]
        %v1234 = vld [vmem:[%s518 + $0x2c] sm:$0xf]
        %v1235 = vld [vmem:[%s518 + $0x30] sm:$0xf]
        %v1236 = vld [vmem:[%s518 + $0x34] sm:$0xf]
        %v1237 = vld [vmem:[%s518 + $0x38] sm:$0xf]
        %v1238 = vld [vmem:[%s518 + $0x3c] sm:$0xf]
        %v1239 = vpack.c.bf16 %v1156, %v1153
        %v1240 = vpack.c.bf16 %v1164, %v1161
        %v1241 = vpack.c.bf16 %v1172, %v1169
        %v1242 = vpack.c.bf16 %v1180, %v1177
        %v1243 = vpack.c.bf16 %v1188, %v1185
        %v1244 = vpack.c.bf16 %v1196, %v1193
        %v1245 = vpack.c.bf16 %v1204, %v1201
        %v1246 = vpack.c.bf16 %v1212, %v1209
        %v1263 = vunpack.c.l.b16 %v1223
        %v1264 = vunpack.c.l.b16 %v1224
        %v1265 = vunpack.c.l.b16 %v1225
        %v1266 = vunpack.c.l.b16 %v1226
        %v1267 = vunpack.c.l.b16 %v1227
        %v1268 = vunpack.c.l.b16 %v1228
        %v1269 = vunpack.c.l.b16 %v1229
        %v1270 = vunpack.c.l.b16 %v1230
        %v1271 = vunpack.c.l.b16 %v1231
        %v1272 = vunpack.c.l.b16 %v1232
        %v1273 = vunpack.c.l.b16 %v1233
        %v1274 = vunpack.c.l.b16 %v1234
        %v1275 = vunpack.c.l.b16 %v1235
        %v1276 = vunpack.c.l.b16 %v1236
        %v1277 = vunpack.c.l.b16 %v1237
        %v1278 = vunpack.c.l.b16 %v1238
        %v1279 = vpack.c.b16 %v1264, %v1263
        %v1280 = vpack.c.b16 %v1266, %v1265
        %v1281 = vpack.c.b16 %v1268, %v1267
        %v1282 = vpack.c.b16 %v1270, %v1269
        %v1283 = vpack.c.b16 %v1272, %v1271
        %v1284 = vpack.c.b16 %v1274, %v1273
        %v1285 = vpack.c.b16 %v1276, %v1275
        %v1286 = vpack.c.b16 %v1278, %v1277
        %1295 = vrot.lane.b32.xlu0 %v1239, 64
        %v1296 = vpop.permute.xlu0 %1295
        %1297 = vrot.lane.b32.xlu0 %v1240, 64
        %v1298 = vpop.permute.xlu0 %1297
        %1299 = vrot.lane.b32.xlu0 %v1241, 64
        %v1300 = vpop.permute.xlu0 %1299
        %1301 = vrot.lane.b32.xlu0 %v1242, 64
        %v1302 = vpop.permute.xlu0 %1301
        %1303 = vrot.lane.b32.xlu0 %v1243, 64
        %v1304 = vpop.permute.xlu0 %1303
        %1305 = vrot.lane.b32.xlu0 %v1244, 64
        %v1306 = vpop.permute.xlu0 %1305
        %1307 = vrot.lane.b32.xlu0 %v1245, 64
        %v1308 = vpop.permute.xlu0 %1307
        %1309 = vrot.lane.b32.xlu0 %v1246, 64
        %v1310 = vpop.permute.xlu0 %1309
        %v1313 = vsel %vm1093, %v1279, %v1296
        %v1317 = vsel %vm1093, %v1280, %v1298
        %v1321 = vsel %vm1093, %v1281, %v1300
        %v1325 = vsel %vm1093, %v1282, %v1302
        %v1329 = vsel %vm1093, %v1283, %v1304
        %v1333 = vsel %vm1093, %v1284, %v1306
        %v1337 = vsel %vm1093, %v1285, %v1308
        %v1341 = vsel %vm1093, %v1286, %v1310
        %v1343 = vld [vmem:[#allocation16] sm:$0xf]
        %v1344 = vld [vmem:[#allocation16 + $0x4] sm:$0xf]
        %v1345 = vld [vmem:[#allocation16 + $0x8] sm:$0xf]
        %v1346 = vld [vmem:[#allocation16 + $0xc] sm:$0xf]
        %v1347 = vld [vmem:[#allocation16 + $0x10] sm:$0xf]
        %v1348 = vld [vmem:[#allocation16 + $0x14] sm:$0xf]
        %v1349 = vld [vmem:[#allocation16 + $0x18] sm:$0xf]
        %v1350 = vld [vmem:[#allocation16 + $0x1c] sm:$0xf]
        %v1351 = vld [vmem:[#allocation16 + $0x20] sm:$0xf]
        %v1352 = vld [vmem:[#allocation16 + $0x24] sm:$0xf]
        %v1353 = vld [vmem:[#allocation16 + $0x28] sm:$0xf]
        %v1354 = vld [vmem:[#allocation16 + $0x2c] sm:$0xf]
        %v1355 = vld [vmem:[#allocation16 + $0x30] sm:$0xf]
        %v1356 = vld [vmem:[#allocation16 + $0x34] sm:$0xf]
        %v1357 = vld [vmem:[#allocation16 + $0x38] sm:$0xf]
        %v1358 = vld [vmem:[#allocation16 + $0x3c] sm:$0xf]
        %v1359 = vld [vmem:[#allocation16 + $0x40] sm:$0xf]
        %v1360 = vld [vmem:[#allocation16 + $0x44] sm:$0xf]
        %v1361 = vld [vmem:[#allocation16 + $0x48] sm:$0xf]
        %v1362 = vld [vmem:[#allocation16 + $0x4c] sm:$0xf]
        %v1363 = vld [vmem:[#allocation16 + $0x50] sm:$0xf]
        %v1364 = vld [vmem:[#allocation16 + $0x54] sm:$0xf]
        %v1365 = vld [vmem:[#allocation16 + $0x58] sm:$0xf]
        %v1366 = vld [vmem:[#allocation16 + $0x5c] sm:$0xf]
        %v1367 = vld [vmem:[#allocation16 + $0x60] sm:$0xf]
        %v1368 = vld [vmem:[#allocation16 + $0x64] sm:$0xf]
        %v1369 = vld [vmem:[#allocation16 + $0x68] sm:$0xf]
        %v1370 = vld [vmem:[#allocation16 + $0x6c] sm:$0xf]
        %v1371 = vld [vmem:[#allocation16 + $0x70] sm:$0xf]
        %v1372 = vld [vmem:[#allocation16 + $0x74] sm:$0xf]
        %v1373 = vld [vmem:[#allocation16 + $0x78] sm:$0xf]
        %v1374 = vld [vmem:[#allocation16 + $0x7c] sm:$0xf]
        %v1375 = vld [vmem:[#allocation17] sm:$0x1]
        %v1377 = vlaneseq
        %v1378 = vshrl.u32 %v1377, 7
        %v1379 = vsub.s32 0, %v1378
        %v1380 = vrot.slane %v1375, %v1379
        %v1414 = vunpack.c.l.b16 %v1343
        %v1415 = vunpack.c.l.b16 %v1344
        %v1416 = vunpack.c.l.b16 %v1345
        %v1417 = vunpack.c.l.b16 %v1346
        %v1418 = vunpack.c.l.b16 %v1347
        %v1419 = vunpack.c.l.b16 %v1348
        %v1420 = vunpack.c.l.b16 %v1349
        %v1421 = vunpack.c.l.b16 %v1350
        %v1422 = vunpack.c.l.b16 %v1351
        %v1423 = vunpack.c.l.b16 %v1352
        %v1424 = vunpack.c.l.b16 %v1353
        %v1425 = vunpack.c.l.b16 %v1354
        %v1426 = vunpack.c.l.b16 %v1355
        %v1427 = vunpack.c.l.b16 %v1356
        %v1428 = vunpack.c.l.b16 %v1357
        %v1429 = vunpack.c.l.b16 %v1358
        %v1430 = vunpack.c.l.b16 %v1359
        %v1431 = vunpack.c.l.b16 %v1360
        %v1432 = vunpack.c.l.b16 %v1361
        %v1433 = vunpack.c.l.b16 %v1362
        %v1434 = vunpack.c.l.b16 %v1363
        %v1435 = vunpack.c.l.b16 %v1364
        %v1436 = vunpack.c.l.b16 %v1365
        %v1437 = vunpack.c.l.b16 %v1366
        %v1438 = vunpack.c.l.b16 %v1367
        %v1439 = vunpack.c.l.b16 %v1368
        %v1440 = vunpack.c.l.b16 %v1369
        %v1441 = vunpack.c.l.b16 %v1370
        %v1442 = vunpack.c.l.b16 %v1371
        %v1443 = vunpack.c.l.b16 %v1372
        %v1444 = vunpack.c.l.b16 %v1373
        %v1445 = vunpack.c.l.b16 %v1374
        %v1446 = vpack.c.b16 %v1415, %v1414
        %v1447 = vpack.c.b16 %v1417, %v1416
        %v1448 = vpack.c.b16 %v1419, %v1418
        %v1449 = vpack.c.b16 %v1421, %v1420
        %v1450 = vpack.c.b16 %v1423, %v1422
        %v1451 = vpack.c.b16 %v1425, %v1424
        %v1452 = vpack.c.b16 %v1427, %v1426
        %v1453 = vpack.c.b16 %v1429, %v1428
        %v1454 = vpack.c.b16 %v1431, %v1430
        %v1455 = vpack.c.b16 %v1433, %v1432
        %v1456 = vpack.c.b16 %v1435, %v1434
        %v1457 = vpack.c.b16 %v1437, %v1436
        %v1458 = vpack.c.b16 %v1439, %v1438
        %v1459 = vpack.c.b16 %v1441, %v1440
        %v1460 = vpack.c.b16 %v1443, %v1442
        %v1461 = vpack.c.b16 %v1445, %v1444
        %1478 = vmatprep.subr.bf16.mxu0 0
        %1479 = vmatpush1.bf16.msra.mxu0 %v1446
        %1480 = vmatprep.subr.bf16.mxu0 0
        %1481 = vmatpush1.bf16.msra.mxu0 %v1447
        %1482 = vmatprep.subr.bf16.mxu0 0
        %1483 = vmatpush1.bf16.msra.mxu0 %v1448
        %1484 = vmatprep.subr.bf16.mxu0 0
        %1485 = vmatpush1.bf16.msra.mxu0 %v1449
        %1486 = vmatprep.subr.bf16.mxu0 0
        %1487 = vmatpush1.bf16.msra.mxu0 %v1450
        %1488 = vmatprep.subr.bf16.mxu0 0
        %1489 = vmatpush1.bf16.msra.mxu0 %v1451
        %1490 = vmatprep.subr.bf16.mxu0 0
        %1491 = vmatpush1.bf16.msra.mxu0 %v1452
        %1492 = vmatprep.subr.bf16.mxu0 0
        %1493 = vmatpush1.bf16.msra.mxu0 %v1453
        %1494 = vmatprep.subr.bf16.mxu0 0
        %1495 = vmatpush1.bf16.msra.mxu0 %v1454
        %1496 = vmatprep.subr.bf16.mxu0 0
        %1497 = vmatpush1.bf16.msra.mxu0 %v1455
        %1498 = vmatprep.subr.bf16.mxu0 0
        %1499 = vmatpush1.bf16.msra.mxu0 %v1456
        %1500 = vmatprep.subr.bf16.mxu0 0
        %1501 = vmatpush1.bf16.msra.mxu0 %v1457
        %1502 = vmatprep.subr.bf16.mxu0 0
        %1503 = vmatpush1.bf16.msra.mxu0 %v1458
        %1504 = vmatprep.subr.bf16.mxu0 0
        %1505 = vmatpush1.bf16.msra.mxu0 %v1459
        %1506 = vmatprep.subr.bf16.mxu0 0
        %1507 = vmatpush1.bf16.msra.mxu0 %v1460
        %1508 = vmatprep.subr.bf16.mxu0 0
        %1509 = vmatpush1.bf16.msra.mxu0 %v1461
        %1510 = vmatprep.mubr.bf16.mxu0 %v1313
        %1511 = vmatmul.mubr.bf16.gmra.mrb[0].mxu0 %v1215
        %v1512 = vpop.f32.mrb[0].mxu0
        %v1513 = vadd.f32 %v1380, %v1512
        %v1514 = vpop.f32.mrb[0].mxu0
        %v1515 = vpop.f32.mrb[0].mxu0
        %v1516 = vadd.f32 %v1380, %v1515
        %v1517 = vpop.f32.mrb[0].mxu0
        %1518 = vmatprep.mubr.bf16.mxu0 %v1317
        %1519 = vmatmul.mubr.bf16.gmra.mrb[0].mxu0 %v1216
        %v1520 = vpop.f32.mrb[0].mxu0
        %v1521 = vadd.f32 %v1380, %v1520
        %v1522 = vpop.f32.mrb[0].mxu0
        %v1523 = vpop.f32.mrb[0].mxu0
        %v1524 = vadd.f32 %v1380, %v1523
        %v1525 = vpop.f32.mrb[0].mxu0
        %1526 = vmatprep.mubr.bf16.mxu0 %v1321
        %1527 = vmatmul.mubr.bf16.gmra.mrb[0].mxu0 %v1217
        %v1528 = vpop.f32.mrb[0].mxu0
        %v1529 = vadd.f32 %v1380, %v1528
        %v1530 = vpop.f32.mrb[0].mxu0
        %v1531 = vpop.f32.mrb[0].mxu0
        %v1532 = vadd.f32 %v1380, %v1531
        %v1533 = vpop.f32.mrb[0].mxu0
        %1534 = vmatprep.mubr.bf16.mxu0 %v1325
        %1535 = vmatmul.mubr.bf16.gmra.mrb[0].mxu0 %v1218
        %v1536 = vpop.f32.mrb[0].mxu0
        %v1537 = vadd.f32 %v1380, %v1536
        %v1538 = vpop.f32.mrb[0].mxu0
        %v1539 = vpop.f32.mrb[0].mxu0
        %v1540 = vadd.f32 %v1380, %v1539
        %v1541 = vpop.f32.mrb[0].mxu0
        %1542 = vmatprep.mubr.bf16.mxu0 %v1329
        %1543 = vmatmul.mubr.bf16.gmra.mrb[0].mxu0 %v1219
        %v1544 = vpop.f32.mrb[0].mxu0
        %v1545 = vadd.f32 %v1380, %v1544
        %v1546 = vpop.f32.mrb[0].mxu0
        %v1547 = vpop.f32.mrb[0].mxu0
        %v1548 = vadd.f32 %v1380, %v1547
        %v1549 = vpop.f32.mrb[0].mxu0
        %1550 = vmatprep.mubr.bf16.mxu0 %v1333
        %1551 = vmatmul.mubr.bf16.gmra.mrb[0].mxu0 %v1220
        %v1552 = vpop.f32.mrb[0].mxu0
        %v1553 = vadd.f32 %v1380, %v1552
        %v1554 = vpop.f32.mrb[0].mxu0
        %v1555 = vpop.f32.mrb[0].mxu0
        %v1556 = vadd.f32 %v1380, %v1555
        %v1557 = vpop.f32.mrb[0].mxu0
        %1558 = vmatprep.mubr.bf16.mxu0 %v1337
        %1559 = vmatmul.mubr.bf16.gmra.mrb[0].mxu0 %v1221
        %v1560 = vpop.f32.mrb[0].mxu0
        %v1561 = vadd.f32 %v1380, %v1560
        %v1562 = vpop.f32.mrb[0].mxu0
        %v1563 = vpop.f32.mrb[0].mxu0
        %v1564 = vadd.f32 %v1380, %v1563
        %v1565 = vpop.f32.mrb[0].mxu0
        %1566 = vmatprep.mubr.bf16.mxu0 %v1341
        %1567 = vmatmul.mubr.bf16.gmra.mrb[0].mxu0 %v1222
        %v1568 = vpop.f32.mrb[0].mxu0
        %v1569 = vadd.f32 %v1380, %v1568
        %v1570 = vpop.f32.mrb[0].mxu0
        %v1571 = vpop.f32.mrb[0].mxu0
        %v1572 = vadd.f32 %v1380, %v1571
        %v1573 = vpop.f32.mrb[0].mxu0
        %1574 = vdwg.mxu0
        %1575 = vadd.xlane.f32.xlu0 %v1513
        %v1576 = vpop.xlane.xlu0 %1575
        %1577 = vadd.xlane.f32.xlu0 %v1516
        %v1578 = vpop.xlane.xlu0 %1577
        %1579 = vadd.xlane.f32.xlu0 %v1521
        %v1580 = vpop.xlane.xlu0 %1579
        %1581 = vadd.xlane.f32.xlu0 %v1524
        %v1582 = vpop.xlane.xlu0 %1581
        %1583 = vadd.xlane.f32.xlu0 %v1529
        %v1584 = vpop.xlane.xlu0 %1583
        %1585 = vadd.xlane.f32.xlu0 %v1532
        %v1586 = vpop.xlane.xlu0 %1585
        %1587 = vadd.xlane.f32.xlu0 %v1537
        %v1588 = vpop.xlane.xlu0 %1587
        %1589 = vadd.xlane.f32.xlu0 %v1540
        %v1590 = vpop.xlane.xlu0 %1589
        %1591 = vadd.xlane.f32.xlu0 %v1545
        %v1592 = vpop.xlane.xlu0 %1591
        %1593 = vadd.xlane.f32.xlu0 %v1548
        %v1594 = vpop.xlane.xlu0 %1593
        %1595 = vadd.xlane.f32.xlu0 %v1553
        %v1596 = vpop.xlane.xlu0 %1595
        %1597 = vadd.xlane.f32.xlu0 %v1556
        %v1598 = vpop.xlane.xlu0 %1597
        %1599 = vadd.xlane.f32.xlu0 %v1561
        %v1600 = vpop.xlane.xlu0 %1599
        %1601 = vadd.xlane.f32.xlu0 %v1564
        %v1602 = vpop.xlane.xlu0 %1601
        %1603 = vadd.xlane.f32.xlu0 %v1569
        %v1604 = vpop.xlane.xlu0 %1603
        %1605 = vadd.xlane.f32.xlu0 %v1572
        %v1606 = vpop.xlane.xlu0 %1605
        %v1607 = vrcp.pop 128.0
        %v1608 = vmul.f32 %v1576, %v1607
        %v1609 = vmul.f32 %v1578, %v1607
        %v1610 = vmul.f32 %v1580, %v1607
        %v1611 = vmul.f32 %v1582, %v1607
        %v1612 = vmul.f32 %v1584, %v1607
        %v1613 = vmul.f32 %v1586, %v1607
        %v1614 = vmul.f32 %v1588, %v1607
        %v1615 = vmul.f32 %v1590, %v1607
        %v1616 = vmul.f32 %v1592, %v1607
        %v1617 = vmul.f32 %v1594, %v1607
        %v1618 = vmul.f32 %v1596, %v1607
        %v1619 = vmul.f32 %v1598, %v1607
        %v1620 = vmul.f32 %v1600, %v1607
        %v1621 = vmul.f32 %v1602, %v1607
        %v1622 = vmul.f32 %v1604, %v1607
        %v1623 = vmul.f32 %v1606, %v1607
        %v1624 = vmul.f32 %v1513, %v1513
        %v1625 = vmul.f32 %v1516, %v1516
        %v1626 = vmul.f32 %v1521, %v1521
        %v1627 = vmul.f32 %v1524, %v1524
        %v1628 = vmul.f32 %v1529, %v1529
        %v1629 = vmul.f32 %v1532, %v1532
        %v1630 = vmul.f32 %v1537, %v1537
        %v1631 = vmul.f32 %v1540, %v1540
        %v1632 = vmul.f32 %v1545, %v1545
        %v1633 = vmul.f32 %v1548, %v1548
        %v1634 = vmul.f32 %v1553, %v1553
        %v1635 = vmul.f32 %v1556, %v1556
        %v1636 = vmul.f32 %v1561, %v1561
        %v1637 = vmul.f32 %v1564, %v1564
        %v1638 = vmul.f32 %v1569, %v1569
        %v1639 = vmul.f32 %v1572, %v1572
        %1640 = vadd.xlane.f32.xlu0 %v1624
        %v1641 = vpop.xlane.xlu0 %1640
        %1642 = vadd.xlane.f32.xlu0 %v1625
        %v1643 = vpop.xlane.xlu0 %1642
        %1644 = vadd.xlane.f32.xlu0 %v1626
        %v1645 = vpop.xlane.xlu0 %1644
        %1646 = vadd.xlane.f32.xlu0 %v1627
        %v1647 = vpop.xlane.xlu0 %1646
        %1648 = vadd.xlane.f32.xlu0 %v1628
        %v1649 = vpop.xlane.xlu0 %1648
        %1650 = vadd.xlane.f32.xlu0 %v1629
        %v1651 = vpop.xlane.xlu0 %1650
        %1652 = vadd.xlane.f32.xlu0 %v1630
        %v1653 = vpop.xlane.xlu0 %1652
        %1654 = vadd.xlane.f32.xlu0 %v1631
        %v1655 = vpop.xlane.xlu0 %1654
        %1656 = vadd.xlane.f32.xlu0 %v1632
        %v1657 = vpop.xlane.xlu0 %1656
        %1658 = vadd.xlane.f32.xlu0 %v1633
        %v1659 = vpop.xlane.xlu0 %1658
        %1660 = vadd.xlane.f32.xlu0 %v1634
        %v1661 = vpop.xlane.xlu0 %1660
        %1662 = vadd.xlane.f32.xlu0 %v1635
        %v1663 = vpop.xlane.xlu0 %1662
        %1664 = vadd.xlane.f32.xlu0 %v1636
        %v1665 = vpop.xlane.xlu0 %1664
        %1666 = vadd.xlane.f32.xlu0 %v1637
        %v1667 = vpop.xlane.xlu0 %1666
        %1668 = vadd.xlane.f32.xlu0 %v1638
        %v1669 = vpop.xlane.xlu0 %1668
        %1670 = vadd.xlane.f32.xlu0 %v1639
        %v1671 = vpop.xlane.xlu0 %1670
        %v1672 = vmul.f32 %v1641, %v1607
        %v1673 = vmul.f32 %v1643, %v1607
        %v1674 = vmul.f32 %v1645, %v1607
        %v1675 = vmul.f32 %v1647, %v1607
        %v1676 = vmul.f32 %v1649, %v1607
        %v1677 = vmul.f32 %v1651, %v1607
        %v1678 = vmul.f32 %v1653, %v1607
        %v1679 = vmul.f32 %v1655, %v1607
        %v1680 = vmul.f32 %v1657, %v1607
        %v1681 = vmul.f32 %v1659, %v1607
        %v1682 = vmul.f32 %v1661, %v1607
        %v1683 = vmul.f32 %v1663, %v1607
        %v1684 = vmul.f32 %v1665, %v1607
        %v1685 = vmul.f32 %v1667, %v1607
        %v1686 = vmul.f32 %v1669, %v1607
        %v1687 = vmul.f32 %v1671, %v1607
        %v1688 = vmul.f32 %v1608, %v1608
        %v1689 = vmul.f32 %v1609, %v1609
        %v1690 = vmul.f32 %v1610, %v1610
        %v1691 = vmul.f32 %v1611, %v1611
        %v1692 = vmul.f32 %v1612, %v1612
        %v1693 = vmul.f32 %v1613, %v1613
        %v1694 = vmul.f32 %v1614, %v1614
        %v1695 = vmul.f32 %v1615, %v1615
        %v1696 = vmul.f32 %v1616, %v1616
        %v1697 = vmul.f32 %v1617, %v1617
        %v1698 = vmul.f32 %v1618, %v1618
        %v1699 = vmul.f32 %v1619, %v1619
        %v1700 = vmul.f32 %v1620, %v1620
        %v1701 = vmul.f32 %v1621, %v1621
        %v1702 = vmul.f32 %v1622, %v1622
        %v1703 = vmul.f32 %v1623, %v1623
        %v1704 = vsub.f32 %v1672, %v1688
        %v1705 = vsub.f32 %v1673, %v1689
        %v1706 = vsub.f32 %v1674, %v1690
        %v1707 = vsub.f32 %v1675, %v1691
        %v1708 = vsub.f32 %v1676, %v1692
        %v1709 = vsub.f32 %v1677, %v1693
        %v1710 = vsub.f32 %v1678, %v1694
        %v1711 = vsub.f32 %v1679, %v1695
        %v1712 = vsub.f32 %v1680, %v1696
        %v1713 = vsub.f32 %v1681, %v1697
        %v1714 = vsub.f32 %v1682, %v1698
        %v1715 = vsub.f32 %v1683, %v1699
        %v1716 = vsub.f32 %v1684, %v1700
        %v1717 = vsub.f32 %v1685, %v1701
        %v1718 = vsub.f32 %v1686, %v1702
        %v1719 = vsub.f32 %v1687, %v1703
        %v1720 = vmax.f32 %v1704, 0.0
        %v1721 = vmax.f32 %v1705, 0.0
        %v1722 = vmax.f32 %v1706, 0.0
        %v1723 = vmax.f32 %v1707, 0.0
        %v1724 = vmax.f32 %v1708, 0.0
        %v1725 = vmax.f32 %v1709, 0.0
        %v1726 = vmax.f32 %v1710, 0.0
        %v1727 = vmax.f32 %v1711, 0.0
        %v1728 = vmax.f32 %v1712, 0.0
        %v1729 = vmax.f32 %v1713, 0.0
        %v1730 = vmax.f32 %v1714, 0.0
        %v1731 = vmax.f32 %v1715, 0.0
        %v1732 = vmax.f32 %v1716, 0.0
        %v1733 = vmax.f32 %v1717, 0.0
        %v1734 = vmax.f32 %v1718, 0.0
        %v1735 = vmax.f32 %v1719, 0.0
        %v1736 = vsub.f32 %v1513, %v1608
        %v1737 = vsub.f32 %v1516, %v1609
        %v1738 = vsub.f32 %v1521, %v1610
        %v1739 = vsub.f32 %v1524, %v1611
        %v1740 = vsub.f32 %v1529, %v1612
        %v1741 = vsub.f32 %v1532, %v1613
        %v1742 = vsub.f32 %v1537, %v1614
        %v1743 = vsub.f32 %v1540, %v1615
        %v1744 = vsub.f32 %v1545, %v1616
        %v1745 = vsub.f32 %v1548, %v1617
        %v1746 = vsub.f32 %v1553, %v1618
        %v1747 = vsub.f32 %v1556, %v1619
        %v1748 = vsub.f32 %v1561, %v1620
        %v1749 = vsub.f32 %v1564, %v1621
        %v1750 = vsub.f32 %v1569, %v1622
        %v1751 = vsub.f32 %v1572, %v1623
        %v1752 = vadd.f32 %v1720, 1e-05
        %v1753 = vadd.f32 %v1721, 1e-05
        %v1754 = vadd.f32 %v1722, 1e-05
        %v1755 = vadd.f32 %v1723, 1e-05
        %v1756 = vadd.f32 %v1724, 1e-05
        %v1757 = vadd.f32 %v1725, 1e-05
        %v1758 = vadd.f32 %v1726, 1e-05
        %v1759 = vadd.f32 %v1727, 1e-05
        %v1760 = vadd.f32 %v1728, 1e-05
        %v1761 = vadd.f32 %v1729, 1e-05
        %v1762 = vadd.f32 %v1730, 1e-05
        %v1763 = vadd.f32 %v1731, 1e-05
        %v1764 = vadd.f32 %v1732, 1e-05
        %v1765 = vadd.f32 %v1733, 1e-05
        %v1766 = vadd.f32 %v1734, 1e-05
        %v1767 = vadd.f32 %v1735, 1e-05
        %v1768 = vrsqrt.pop %v1752
        %v1769 = vrsqrt.pop %v1753
        %v1770 = vrsqrt.pop %v1754
        %v1771 = vrsqrt.pop %v1755
        %v1772 = vrsqrt.pop %v1756
        %v1773 = vrsqrt.pop %v1757
        %v1774 = vrsqrt.pop %v1758
        %v1775 = vrsqrt.pop %v1759
        %v1776 = vrsqrt.pop %v1760
        %v1777 = vrsqrt.pop %v1761
        %v1778 = vrsqrt.pop %v1762
        %v1779 = vrsqrt.pop %v1763
        %v1780 = vrsqrt.pop %v1764
        %v1781 = vrsqrt.pop %v1765
        %v1782 = vrsqrt.pop %v1766
        %v1783 = vrsqrt.pop %v1767
        %v1784 = vmul.f32 %v1736, %v1768
        %v1785 = vmul.f32 %v1737, %v1769
        %v1786 = vmul.f32 %v1738, %v1770
        %v1787 = vmul.f32 %v1739, %v1771
        %v1788 = vmul.f32 %v1740, %v1772
        %v1789 = vmul.f32 %v1741, %v1773
        %v1790 = vmul.f32 %v1742, %v1774
        %v1791 = vmul.f32 %v1743, %v1775
        %v1792 = vmul.f32 %v1744, %v1776
        %v1793 = vmul.f32 %v1745, %v1777
        %v1794 = vmul.f32 %v1746, %v1778
        %v1795 = vmul.f32 %v1747, %v1779
        %v1796 = vmul.f32 %v1748, %v1780
        %v1797 = vmul.f32 %v1749, %v1781
        %v1798 = vmul.f32 %v1750, %v1782
        %v1799 = vmul.f32 %v1751, %v1783
        %v1800 = vld [vmem:[#allocation19] sm:$0x1]
        %v1802 = vlaneseq
        %v1803 = vshrl.u32 %v1802, 7
        %v1804 = vsub.s32 0, %v1803
        %v1805 = vrot.slane %v1800, %v1804
        %v1807 = vmul.f32 %v1784, %v1805
        %v1808 = vmul.f32 %v1785, %v1805
        %v1809 = vmul.f32 %v1786, %v1805
        %v1810 = vmul.f32 %v1787, %v1805
        %v1811 = vmul.f32 %v1788, %v1805
        %v1812 = vmul.f32 %v1789, %v1805
        %v1813 = vmul.f32 %v1790, %v1805
        %v1814 = vmul.f32 %v1791, %v1805
        %v1815 = vmul.f32 %v1792, %v1805
        %v1816 = vmul.f32 %v1793, %v1805
        %v1817 = vmul.f32 %v1794, %v1805
        %v1818 = vmul.f32 %v1795, %v1805
        %v1819 = vmul.f32 %v1796, %v1805
        %v1820 = vmul.f32 %v1797, %v1805
        %v1821 = vmul.f32 %v1798, %v1805
        %v1822 = vmul.f32 %v1799, %v1805
        %v1823 = vld [vmem:[#allocation20] sm:$0x1]
        %v1825 = vlaneseq
        %v1826 = vshrl.u32 %v1825, 7
        %v1827 = vsub.s32 0, %v1826
        %v1828 = vrot.slane %v1823, %v1827
        %v1830 = vadd.f32 %v1807, %v1828
        %v1831 = vadd.f32 %v1808, %v1828
        %v1832 = vadd.f32 %v1809, %v1828
        %v1833 = vadd.f32 %v1810, %v1828
        %v1834 = vadd.f32 %v1811, %v1828
        %v1835 = vadd.f32 %v1812, %v1828
        %v1836 = vadd.f32 %v1813, %v1828
        %v1837 = vadd.f32 %v1814, %v1828
        %v1838 = vadd.f32 %v1815, %v1828
        %v1839 = vadd.f32 %v1816, %v1828
        %v1840 = vadd.f32 %v1817, %v1828
        %v1841 = vadd.f32 %v1818, %v1828
        %v1842 = vadd.f32 %v1819, %v1828
        %v1843 = vadd.f32 %v1820, %v1828
        %v1844 = vadd.f32 %v1821, %v1828
        %v1845 = vadd.f32 %v1822, %v1828
        %v1846 = vmax.f32 %v1830, 0.0
        %v1847 = vmax.f32 %v1831, 0.0
        %v1848 = vmax.f32 %v1832, 0.0
        %v1849 = vmax.f32 %v1833, 0.0
        %v1850 = vmax.f32 %v1834, 0.0
        %v1851 = vmax.f32 %v1835, 0.0
        %v1852 = vmax.f32 %v1836, 0.0
        %v1853 = vmax.f32 %v1837, 0.0
        %v1854 = vmax.f32 %v1838, 0.0
        %v1855 = vmax.f32 %v1839, 0.0
        %v1856 = vmax.f32 %v1840, 0.0
        %v1857 = vmax.f32 %v1841, 0.0
        %v1858 = vmax.f32 %v1842, 0.0
        %v1859 = vmax.f32 %v1843, 0.0
        %v1860 = vmax.f32 %v1844, 0.0
        %v1861 = vmax.f32 %v1845, 0.0
        %1862 = vst [vmem:[%s603] sm:$0xff] %v1846
        %1863 = vst [vmem:[%s603 + $0x8] sm:$0xff] %v1847
        %1864 = vst [vmem:[%s603 + $0x10] sm:$0xff] %v1848
        %1865 = vst [vmem:[%s603 + $0x18] sm:$0xff] %v1849
        %1866 = vst [vmem:[%s603 + $0x20] sm:$0xff] %v1850
        %1867 = vst [vmem:[%s603 + $0x28] sm:$0xff] %v1851
        %1868 = vst [vmem:[%s603 + $0x30] sm:$0xff] %v1852
        %1869 = vst [vmem:[%s603 + $0x38] sm:$0xff] %v1853
        %1870 = vst [vmem:[%s603 + $0x40] sm:$0xff] %v1854
        %1871 = vst [vmem:[%s603 + $0x48] sm:$0xff] %v1855
        %1872 = vst [vmem:[%s603 + $0x50] sm:$0xff] %v1856
        %1873 = vst [vmem:[%s603 + $0x58] sm:$0xff] %v1857
        %1874 = vst [vmem:[%s603 + $0x60] sm:$0xff] %v1858
        %1875 = vst [vmem:[%s603 + $0x68] sm:$0xff] %v1859
        %1876 = vst [vmem:[%s603 + $0x70] sm:$0xff] %v1860
        %1877 = vst [vmem:[%s603 + $0x78] sm:$0xff] %v1861
        %s1878 = sand.u32 %s307, 1
        %s1879 = scalar_lea.sflag [#allocation4], %s1878
        %s1880 = sand.u32 %s307, 1
        %s1881 = smul.addr %s1880, 128
        %s1882 = scalar_lea.vmem [#allocation22], %s1881
        // Predicated region
        $region117: #{tpu_custom_call.1} parent=67 // pred_check
          %p1883 = pneg %p317
        $region118: #{tpu_custom_call.1} parent=67 // pred_check_branch
          %1885 = sbr.rel (%p1883) target = $region120
        $region119: #{tpu_custom_call.1} parent=67 // pred_region
          %s1886 = smul.u32 16, %s37
          %s1888 = ssub.s32 2048, 2048
          %1889 = vsyncadd %s1879, %s1888
          %s1890 = smul.addr %s1886, 128
          %s1891 = scalar_lea.hbm %s12, %s1890
          %s1892 = sshll.u32 %s1882, 4
          %s1893 = int_to_ptr.vmem [resolvable:$true] %s1892
          %1898 = dma.vmem_to_hbm [thread:$0]  %s1893, 2048, %s1891, %s1879, 128, 128, 8
        $region120: #{tpu_custom_call.1} parent=67 // pred_fallthru
          _
      $region68: #{tpu_custom_call.1} parent=5 // pred_fallthru
        _
      %p1899 = scmp.le.s32.totalorder 2, %s32
      // Predicated region
      $region121: #{tpu_custom_call.1} parent=5 // pred_check
        %p1900 = pneg %p1899
      $region122: #{tpu_custom_call.1} parent=5 // pred_check_branch
        %1902 = sbr.rel (%p1900) target = $region124
      $region123: #{tpu_custom_call.1} parent=5 // pred_region
        %s1903 = ssub.s32 %s32, 2
        // Predicated region
        $region125: #{tpu_custom_call.1} parent=123 // pred_check
          %p1904 = pneg %p323
        $region126: #{tpu_custom_call.1} parent=123 // pred_check_branch
          %1906 = sbr.rel (%p1904) target = $region128
        $region127: #{tpu_custom_call.1} parent=123 // pred_region
          %s1907 = sand.u32 %s308, 1
          %s1908 = scalar_lea.sflag [#allocation4], %s1907
          %s1909 = sand.u32 %s308, 1
          %s1910 = smul.addr %s1909, 128
          %s1911 = scalar_lea.vmem [#allocation22], %s1910
          %1912 = dma.done %s1908, 2048
        $region128: #{tpu_custom_call.1} parent=123 // pred_fallthru
          _
      $region124: #{tpu_custom_call.1} parent=5 // pred_fallthru
        _
    $region6: #{tpu_custom_call.1} parent=1 // loop_footer
      %s36 = sadd.s32 1, %s32
    $region7: #{tpu_custom_call.1} parent=1 // loop_footer_branch
      %31 = sbr.rel target = $region3
    $region8: #{tpu_custom_call.1} parent=1 // loop_exit
      _
    %1913 = vsyncpa [#allocation3], 1
    %s1914 = scalar_lea.sflag [#allocation3], 1
    %1915 = vsyncpa %s1914, 1
    %1916 = vsyncpa [#allocation6], 1
    %s1917 = scalar_lea.sflag [#allocation6], 1
    %1918 = vsyncpa %s1917, 1
    %1919 = vsyncpa [#allocation9], 1
    %1920 = vsyncpa [#allocation12], 1
    %1921 = vsyncpa [#allocation15], 1
    %1922 = vsyncpa [#allocation18], 1
    %1923 = vsyncpa [#allocation21], 1
    %1924 = vsyncpa [#allocation4], 1
    %s1925 = scalar_lea.sflag [#allocation4], 1
    %1926 = vsyncpa %s1925, 1

</llo_original>
